<compile_context>
chip_gen: v7x
topology: tpu7x:2x2x1
jax: 0.10.0
libtpu: 0.0.40
codegen_flags: <defaults>
</compile_context>

<pallas_src>
import functools

import jax
import jax.numpy as jnp
from jax import lax
from jax.experimental import pallas as pl
from jax.experimental.pallas import tpu as pltpu


# ----------------------------------------------------------------------------
# Pallas kernel: fused 3x3 conv (stride 1, pad 1) + bias + PReLU for one image
# ----------------------------------------------------------------------------
def _upsample_conv_kernel(x_ref, w_ref, b_ref, alpha_ref, o_ref,
                          *, H, W, C_in, C_out):
    """
    x_ref:     (1, H+2, W+2, C_in)  f32   zero-padded NHWC image
    w_ref:     (9, C_in, C_out)     bf16  tap-major weights (dy*3+dx, cin, cout)
    b_ref:     (1, C_out)           f32   conv bias
    alpha_ref: (1,)                 f32   PReLU scalar (SMEM)
    o_ref:     (1, H*W, C_out)      f32   conv+bias+PReLU output, row = h*W + w
    """
    x0 = x_ref[0]                                    # (H+2, W+2, C_in), one load
    acc = jnp.zeros((H * W, C_out), jnp.float32)
    # 3x3 conv == sum of 9 shifted 1x1 convs; taps are static slices of the
    # VMEM-resident padded image (no im2col matrix in HBM).
    for dy in range(3):
        for dx in range(3):
            a = x0[dy:dy + H, dx:dx + W, :].reshape(H * W, C_in)
            a = a.astype(jnp.bfloat16)               # bf16 MXU operand
            acc = acc + jnp.dot(a, w_ref[dy * 3 + dx],
                                preferred_element_type=jnp.float32)
    y = acc + b_ref[...]                             # bias (broadcast over rows)
    alpha = alpha_ref[0]                             # scalar PReLU parameter
    y = jnp.maximum(y, 0.0) + alpha * jnp.minimum(y, 0.0)
    o_ref[0] = y                                     # single f32 store per tile


# ----------------------------------------------------------------------------
# Wrapper: NCHW in -> conv kernel -> PixelShuffle(2) -> NCHW out
# ----------------------------------------------------------------------------
def upsample_block_forward(params, x_nchw):
    """PReLU(PixelShuffle(2)(Conv2d(C, 4C, 3, 1, 1)(x))) for NCHW input."""
    N, C_in, H, W = x_nchw.shape
    C_out = 4 * C_in

    # NCHW -> NHWC, zero-pad spatially (pad=1).  Input stays f32 (tiny); the
    # MXU operands are cast to bf16 (weights here, activation taps in-kernel).
    x = jnp.transpose(x_nchw, (0, 2, 3, 1)).astype(jnp.float32)
    x_pad = jnp.pad(x, ((0, 0), (1, 1), (1, 1), (0, 0)))

    # OIHW -> (tap = dy*3+dx, cin, cout), cast once to bf16 for the MXU.
    w_taps = jnp.transpose(params["w"], (2, 3, 1, 0)).reshape(9, C_in, C_out)
    w_taps = w_taps.astype(jnp.bfloat16)
    bias = params["b"].reshape(1, C_out).astype(jnp.float32)
    alpha = jnp.reshape(params["alpha"], (1,)).astype(jnp.float32)

    y = pl.pallas_call(
        functools.partial(_upsample_conv_kernel,
                          H=H, W=W, C_in=C_in, C_out=C_out),
        out_shape=jax.ShapeDtypeStruct((N, H * W, C_out), jnp.float32),
        grid=(N,),
        in_specs=[
            pl.BlockSpec((1, H + 2, W + 2, C_in), lambda n: (n, 0, 0, 0)),
            pl.BlockSpec((9, C_in, C_out), lambda n: (0, 0, 0)),   # weights: 1 DMA
            pl.BlockSpec((1, C_out), lambda n: (0, 0)),            # bias
            pl.BlockSpec(memory_space=pltpu.MemorySpace.SMEM),     # PReLU alpha
        ],
        out_specs=pl.BlockSpec((1, H * W, C_out), lambda n: (n, 0, 0)),
        # Default scoped-VMEM limit is plenty for the ~KiB working set; no
        # explicit vmem_limit_bytes (96 MiB was illegal on v7x's 64 MiB VMEM).
        compiler_params=pltpu.CompilerParams(
            dimension_semantics=("parallel",),   # v7x: one image per TensorCore
        ),
    )(x_pad, w_taps, bias, alpha)

    # TODO(synk): PixelShuffle(2) and NHWC->NCHW are pure permutations; they are
    # implemented with XLA reshape/transpose glue rather than inside the kernel.
    # out[n, c, 2h+i, 2w+j] = y[n, h*W+w, c*4 + i*2 + j]
    y = y.reshape(N, H, W, C_in, 2, 2)                 # (n, h, w, c, i, j)
    out = jnp.transpose(y, (0, 3, 1, 4, 2, 5))         # (n, c, h, i, w, j)
    return out.reshape(N, C_in, 2 * H, 2 * W)


# ----------------------------------------------------------------------------
# Pure-JAX reference (correctness check)
# ----------------------------------------------------------------------------
def upsample_block_ref(params, x_nchw):
    y = lax.conv_general_dilated(
        x_nchw.astype(jnp.float32), params["w"].astype(jnp.float32),
        window_strides=(1, 1), padding=((1, 1), (1, 1)),
        dimension_numbers=("NCHW", "OIHW", "NCHW"))
    y = y + params["b"].reshape(1, -1, 1, 1)
    N, C4, H, W = y.shape
    C = C4 // 4
    y = y.reshape(N, C, 2, 2, H, W).transpose(0, 1, 4, 2, 5, 3)
    y = y.reshape(N, C, 2 * H, 2 * W)
    return jnp.maximum(y, 0.0) + params["alpha"] * jnp.minimum(y, 0.0)


if __name__ == "__main__":
    key = jax.random.PRNGKey(0)
    k_w, k_b, k_x = jax.random.split(key, 3)

    N, C_in, H, W = 2, 4, 16, 16
    params = {
        "w": 0.1 * jax.random.normal(k_w, (4 * C_in, C_in, 3, 3), jnp.float32),
        "b": 0.1 * jax.random.normal(k_b, (4 * C_in,), jnp.float32),
        "alpha": jnp.float32(0.25),          # nn.PReLU() default init
    }
    x = jax.random.normal(k_x, (N, C_in, H, W), jnp.float32)

    fwd = jax.jit(upsample_block_forward)
    out = jax.block_until_ready(fwd(params, x))

    assert out.shape == (N, C_in, 2 * H, 2 * W), out.shape
    assert bool(jnp.all(jnp.isfinite(out)))

    # Check against the pure-JAX reference (bf16 MXU operands -> loose tol).
    ref = upsample_block_ref(params, x)
    max_err = float(jnp.max(jnp.abs(out - ref)))
    assert max_err < 5e-2, max_err

    print("KERNEL_OK")
</pallas_src>

<mosaic_0001>
module attributes {stable_mosaic.version = 11 : i64} {
  func.func @_upsample_conv_kernel(%arg0: i32, %arg1: memref<1x18x18x4xf32, #tpu.memory_space<vmem>>, %arg2: memref<9x4x16xbf16, #tpu.memory_space<vmem>>, %arg3: memref<1x16xf32, #tpu.memory_space<vmem>>, %arg4: memref<1xf32, #tpu.memory_space<smem>>, %arg5: memref<1x256x16xf32, #tpu.memory_space<vmem>>) attributes {dimension_semantics = [#tpu.dimension_semantics<parallel>], iteration_bounds = array<i64: 2>, scalar_prefetch = 0 : i64, scratch_operands = 0 : i64, tpu.core_type = #tpu.core_type<tc>, window_params = [{transform_indices = @transform_0, window_bounds = array<i64: 1, 18, 18, 4>}, {pipeline_mode = #tpu.pipeline_mode<synchronous>, transform_indices = @transform_1, window_bounds = array<i64: 9, 4, 16>}, {pipeline_mode = #tpu.pipeline_mode<synchronous>, transform_indices = @transform_2, window_bounds = array<i64: 1, 16>}, {transform_indices = @transform_3, window_bounds = array<i64: 1>}, {transform_indices = @transform_4, window_bounds = array<i64: 1, 256, 16>}]} {
    %c0 = arith.constant 0 : index
    %c0_0 = arith.constant 0 : index
    %c0_1 = arith.constant 0 : index
    %c0_2 = arith.constant 0 : index
    %0 = vector.load %arg1[%c0, %c0_0, %c0_1, %c0_2] : memref<1x18x18x4xf32, #tpu.memory_space<vmem>>, vector<1x18x18x4xf32>
    %1 = vector.shape_cast %0 : vector<1x18x18x4xf32> to vector<18x18x4xf32>
    %cst = arith.constant 0.000000e+00 : f32
    %2 = vector.broadcast %cst : f32 to vector<256x16xf32>
    %3 = vector.extract_strided_slice %1 {offsets = [0, 0, 0], sizes = [16, 16, 4], strides = [1, 1, 1]} : vector<18x18x4xf32> to vector<16x16x4xf32>
    %4 = vector.shape_cast %3 : vector<16x16x4xf32> to vector<256x4xf32>
    %5 = arith.truncf %4 : vector<256x4xf32> to vector<256x4xbf16>
    %c0_3 = arith.constant 0 : index
    %c0_4 = arith.constant 0 : index
    %c0_5 = arith.constant 0 : index
    %6 = vector.load %arg2[%c0_3, %c0_4, %c0_5] : memref<9x4x16xbf16, #tpu.memory_space<vmem>>, vector<1x4x16xbf16>
    %7 = vector.shape_cast %6 : vector<1x4x16xbf16> to vector<4x16xbf16>
    %cst_6 = arith.constant dense<0.000000e+00> : vector<256x16xf32>
    %8 = tpu.matmul %5, %7, %cst_6 {dimension_numbers = #tpu.dot_dimension_numbers<[1], [0], [0], [1], [0, 0, 1, 1], [], []>} : vector<256x4xbf16>, vector<4x16xbf16>, vector<256x16xf32> -> vector<256x16xf32>
    %9 = arith.addf %2, %8 : vector<256x16xf32>
    %10 = vector.extract_strided_slice %1 {offsets = [0, 1, 0], sizes = [16, 16, 4], strides = [1, 1, 1]} : vector<18x18x4xf32> to vector<16x16x4xf32>
    %11 = vector.shape_cast %10 : vector<16x16x4xf32> to vector<256x4xf32>
    %12 = arith.truncf %11 : vector<256x4xf32> to vector<256x4xbf16>
    %c1 = arith.constant 1 : index
    %c0_7 = arith.constant 0 : index
    %c0_8 = arith.constant 0 : index
    %13 = vector.load %arg2[%c1, %c0_7, %c0_8] : memref<9x4x16xbf16, #tpu.memory_space<vmem>>, vector<1x4x16xbf16>
    %14 = vector.shape_cast %13 : vector<1x4x16xbf16> to vector<4x16xbf16>
    %cst_9 = arith.constant dense<0.000000e+00> : vector<256x16xf32>
    %15 = tpu.matmul %12, %14, %cst_9 {dimension_numbers = #tpu.dot_dimension_numbers<[1], [0], [0], [1], [0, 0, 1, 1], [], []>} : vector<256x4xbf16>, vector<4x16xbf16>, vector<256x16xf32> -> vector<256x16xf32>
    %16 = arith.addf %9, %15 : vector<256x16xf32>
    %17 = vector.extract_strided_slice %1 {offsets = [0, 2, 0], sizes = [16, 16, 4], strides = [1, 1, 1]} : vector<18x18x4xf32> to vector<16x16x4xf32>
    %18 = vector.shape_cast %17 : vector<16x16x4xf32> to vector<256x4xf32>
    %19 = arith.truncf %18 : vector<256x4xf32> to vector<256x4xbf16>
    %c2 = arith.constant 2 : index
    %c0_10 = arith.constant 0 : index
    %c0_11 = arith.constant 0 : index
    %20 = vector.load %arg2[%c2, %c0_10, %c0_11] : memref<9x4x16xbf16, #tpu.memory_space<vmem>>, vector<1x4x16xbf16>
    %21 = vector.shape_cast %20 : vector<1x4x16xbf16> to vector<4x16xbf16>
    %cst_12 = arith.constant dense<0.000000e+00> : vector<256x16xf32>
    %22 = tpu.matmul %19, %21, %cst_12 {dimension_numbers = #tpu.dot_dimension_numbers<[1], [0], [0], [1], [0, 0, 1, 1], [], []>} : vector<256x4xbf16>, vector<4x16xbf16>, vector<256x16xf32> -> vector<256x16xf32>
    %23 = arith.addf %16, %22 : vector<256x16xf32>
    %24 = vector.extract_strided_slice %1 {offsets = [1, 0, 0], sizes = [16, 16, 4], strides = [1, 1, 1]} : vector<18x18x4xf32> to vector<16x16x4xf32>
    %25 = vector.shape_cast %24 : vector<16x16x4xf32> to vector<256x4xf32>
    %26 = arith.truncf %25 : vector<256x4xf32> to vector<256x4xbf16>
    %c3 = arith.constant 3 : index
    %c0_13 = arith.constant 0 : index
    %c0_14 = arith.constant 0 : index
    %27 = vector.load %arg2[%c3, %c0_13, %c0_14] : memref<9x4x16xbf16, #tpu.memory_space<vmem>>, vector<1x4x16xbf16>
    %28 = vector.shape_cast %27 : vector<1x4x16xbf16> to vector<4x16xbf16>
    %cst_15 = arith.constant dense<0.000000e+00> : vector<256x16xf32>
    %29 = tpu.matmul %26, %28, %cst_15 {dimension_numbers = #tpu.dot_dimension_numbers<[1], [0], [0], [1], [0, 0, 1, 1], [], []>} : vector<256x4xbf16>, vector<4x16xbf16>, vector<256x16xf32> -> vector<256x16xf32>
    %30 = arith.addf %23, %29 : vector<256x16xf32>
    %31 = vector.extract_strided_slice %1 {offsets = [1, 1, 0], sizes = [16, 16, 4], strides = [1, 1, 1]} : vector<18x18x4xf32> to vector<16x16x4xf32>
    %32 = vector.shape_cast %31 : vector<16x16x4xf32> to vector<256x4xf32>
    %33 = arith.truncf %32 : vector<256x4xf32> to vector<256x4xbf16>
    %c4 = arith.constant 4 : index
    %c0_16 = arith.constant 0 : index
    %c0_17 = arith.constant 0 : index
    %34 = vector.load %arg2[%c4, %c0_16, %c0_17] : memref<9x4x16xbf16, #tpu.memory_space<vmem>>, vector<1x4x16xbf16>
    %35 = vector.shape_cast %34 : vector<1x4x16xbf16> to vector<4x16xbf16>
    %cst_18 = arith.constant dense<0.000000e+00> : vector<256x16xf32>
    %36 = tpu.matmul %33, %35, %cst_18 {dimension_numbers = #tpu.dot_dimension_numbers<[1], [0], [0], [1], [0, 0, 1, 1], [], []>} : vector<256x4xbf16>, vector<4x16xbf16>, vector<256x16xf32> -> vector<256x16xf32>
    %37 = arith.addf %30, %36 : vector<256x16xf32>
    %38 = vector.extract_strided_slice %1 {offsets = [1, 2, 0], sizes = [16, 16, 4], strides = [1, 1, 1]} : vector<18x18x4xf32> to vector<16x16x4xf32>
    %39 = vector.shape_cast %38 : vector<16x16x4xf32> to vector<256x4xf32>
    %40 = arith.truncf %39 : vector<256x4xf32> to vector<256x4xbf16>
    %c5 = arith.constant 5 : index
    %c0_19 = arith.constant 0 : index
    %c0_20 = arith.constant 0 : index
    %41 = vector.load %arg2[%c5, %c0_19, %c0_20] : memref<9x4x16xbf16, #tpu.memory_space<vmem>>, vector<1x4x16xbf16>
    %42 = vector.shape_cast %41 : vector<1x4x16xbf16> to vector<4x16xbf16>
    %cst_21 = arith.constant dense<0.000000e+00> : vector<256x16xf32>
    %43 = tpu.matmul %40, %42, %cst_21 {dimension_numbers = #tpu.dot_dimension_numbers<[1], [0], [0], [1], [0, 0, 1, 1], [], []>} : vector<256x4xbf16>, vector<4x16xbf16>, vector<256x16xf32> -> vector<256x16xf32>
    %44 = arith.addf %37, %43 : vector<256x16xf32>
    %45 = vector.extract_strided_slice %1 {offsets = [2, 0, 0], sizes = [16, 16, 4], strides = [1, 1, 1]} : vector<18x18x4xf32> to vector<16x16x4xf32>
    %46 = vector.shape_cast %45 : vector<16x16x4xf32> to vector<256x4xf32>
    %47 = arith.truncf %46 : vector<256x4xf32> to vector<256x4xbf16>
    %c6 = arith.constant 6 : index
    %c0_22 = arith.constant 0 : index
    %c0_23 = arith.constant 0 : index
    %48 = vector.load %arg2[%c6, %c0_22, %c0_23] : memref<9x4x16xbf16, #tpu.memory_space<vmem>>, vector<1x4x16xbf16>
    %49 = vector.shape_cast %48 : vector<1x4x16xbf16> to vector<4x16xbf16>
    %cst_24 = arith.constant dense<0.000000e+00> : vector<256x16xf32>
    %50 = tpu.matmul %47, %49, %cst_24 {dimension_numbers = #tpu.dot_dimension_numbers<[1], [0], [0], [1], [0, 0, 1, 1], [], []>} : vector<256x4xbf16>, vector<4x16xbf16>, vector<256x16xf32> -> vector<256x16xf32>
    %51 = arith.addf %44, %50 : vector<256x16xf32>
    %52 = vector.extract_strided_slice %1 {offsets = [2, 1, 0], sizes = [16, 16, 4], strides = [1, 1, 1]} : vector<18x18x4xf32> to vector<16x16x4xf32>
    %53 = vector.shape_cast %52 : vector<16x16x4xf32> to vector<256x4xf32>
    %54 = arith.truncf %53 : vector<256x4xf32> to vector<256x4xbf16>
    %c7 = arith.constant 7 : index
    %c0_25 = arith.constant 0 : index
    %c0_26 = arith.constant 0 : index
    %55 = vector.load %arg2[%c7, %c0_25, %c0_26] : memref<9x4x16xbf16, #tpu.memory_space<vmem>>, vector<1x4x16xbf16>
    %56 = vector.shape_cast %55 : vector<1x4x16xbf16> to vector<4x16xbf16>
    %cst_27 = arith.constant dense<0.000000e+00> : vector<256x16xf32>
    %57 = tpu.matmul %54, %56, %cst_27 {dimension_numbers = #tpu.dot_dimension_numbers<[1], [0], [0], [1], [0, 0, 1, 1], [], []>} : vector<256x4xbf16>, vector<4x16xbf16>, vector<256x16xf32> -> vector<256x16xf32>
    %58 = arith.addf %51, %57 : vector<256x16xf32>
    %59 = vector.extract_strided_slice %1 {offsets = [2, 2, 0], sizes = [16, 16, 4], strides = [1, 1, 1]} : vector<18x18x4xf32> to vector<16x16x4xf32>
    %60 = vector.shape_cast %59 : vector<16x16x4xf32> to vector<256x4xf32>
    %61 = arith.truncf %60 : vector<256x4xf32> to vector<256x4xbf16>
    %c8 = arith.constant 8 : index
    %c0_28 = arith.constant 0 : index
    %c0_29 = arith.constant 0 : index
    %62 = vector.load %arg2[%c8, %c0_28, %c0_29] : memref<9x4x16xbf16, #tpu.memory_space<vmem>>, vector<1x4x16xbf16>
    %63 = vector.shape_cast %62 : vector<1x4x16xbf16> to vector<4x16xbf16>
    %cst_30 = arith.constant dense<0.000000e+00> : vector<256x16xf32>
    %64 = tpu.matmul %61, %63, %cst_30 {dimension_numbers = #tpu.dot_dimension_numbers<[1], [0], [0], [1], [0, 0, 1, 1], [], []>} : vector<256x4xbf16>, vector<4x16xbf16>, vector<256x16xf32> -> vector<256x16xf32>
    %65 = arith.addf %58, %64 : vector<256x16xf32>
    %c0_31 = arith.constant 0 : index
    %c0_32 = arith.constant 0 : index
    %66 = vector.load %arg3[%c0_31, %c0_32] : memref<1x16xf32, #tpu.memory_space<vmem>>, vector<1x16xf32>
    %67 = vector.broadcast %66 : vector<1x16xf32> to vector<256x16xf32>
    %68 = arith.addf %65, %67 : vector<256x16xf32>
    %c0_33 = arith.constant 0 : index
    %69 = memref.load %arg4[%c0_33] : memref<1xf32, #tpu.memory_space<smem>>
    %cst_34 = arith.constant 0.000000e+00 : f32
    %70 = vector.broadcast %cst_34 : f32 to vector<256x16xf32>
    %71 = arith.maximumf %68, %70 : vector<256x16xf32>
    %cst_35 = arith.constant 0.000000e+00 : f32
    %72 = vector.broadcast %cst_35 : f32 to vector<256x16xf32>
    %73 = arith.minimumf %68, %72 : vector<256x16xf32>
    %74 = vector.broadcast %69 : f32 to vector<256x16xf32>
    %75 = arith.mulf %74, %73 : vector<256x16xf32>
    %76 = arith.addf %71, %75 : vector<256x16xf32>
    %c0_36 = arith.constant 0 : index
    %c0_37 = arith.constant 0 : index
    %c0_38 = arith.constant 0 : index
    %77 = vector.load %arg5[%c0_36, %c0_37, %c0_38] : memref<1x256x16xf32, #tpu.memory_space<vmem>>, vector<1x256x16xf32>
    %78 = vector.shape_cast %77 : vector<1x256x16xf32> to vector<256x16xf32>
    %79 = vector.shape_cast %76 : vector<256x16xf32> to vector<1x256x16xf32>
    tpu.vector_store %arg5[%c0_36, %c0_37, %c0_38], %79 {strides = array<i32>} : memref<1x256x16xf32, #tpu.memory_space<vmem>>, vector<1x256x16xf32>,
    return
  }
  func.func @transform_0(%arg0: i32) -> (i32, i32, i32, i32) {
    %c0_i32 = arith.constant 0 : i32
    %c0_i32_0 = arith.constant 0 : i32
    %c0_i32_1 = arith.constant 0 : i32
    %c0_i32_2 = arith.constant 0 : i32
    return %arg0, %c0_i32, %c0_i32_0, %c0_i32_1 : i32, i32, i32, i32
  }
  func.func @transform_1(%arg0: i32) -> (i32, i32, i32) {
    %c0_i32 = arith.constant 0 : i32
    %c0_i32_0 = arith.constant 0 : i32
    %c0_i32_1 = arith.constant 0 : i32
    %c0_i32_2 = arith.constant 0 : i32
    return %c0_i32, %c0_i32_0, %c0_i32_1 : i32, i32, i32
  }
  func.func @transform_2(%arg0: i32) -> (i32, i32) {
    %c0_i32 = arith.constant 0 : i32
    %c0_i32_0 = arith.constant 0 : i32
    %c0_i32_1 = arith.constant 0 : i32
    return %c0_i32, %c0_i32_0 : i32, i32
  }
  func.func @transform_3(%arg0: i32) -> i32 {
    %c0_i32 = arith.constant 0 : i32
    %c0_i32_0 = arith.constant 0 : i32
    return %c0_i32 : i32
  }
  func.func @transform_4(%arg0: i32) -> (i32, i32, i32) {
    %c0_i32 = arith.constant 0 : i32
    %c0_i32_0 = arith.constant 0 : i32
    %c0_i32_1 = arith.constant 0 : i32
    return %arg0, %c0_i32, %c0_i32_0 : i32, i32, i32
  }
}

</mosaic_0001>

<llo_original>
// kernel: upsample_block_forward.1
$region0: #{upsample_block_forward.1}
  #allocation0 [shape = 'u32[]', space=smem, size = 0x4, offset = 0x4, fixed_abs, tag = 'smem constant byte address 0x4 - core index']
  #allocation1 [shape = 'u32[144,128]{1,0:T(1,128)}', space=vmem, size = 0x12000, scoped, tag = 'internal scratch']
  #allocation2 [shape = 'f32[1]{0:T(128)S(6)}', space=smem, size = 0x200, scoped, tag = 'scoped memory for upsample_block_forward.1']
  %s0 = inlined_call_operand.vmem [shape: f32[2,18,18,4], index: 0, kind: input, shape index: {}]
  %s1 = inlined_call_operand.vmem [shape: bf16[9,4,16], index: 1, kind: input, shape index: {}]
  %s2 = inlined_call_operand.vmem [shape: f32[1,16], index: 2, kind: input, shape index: {}]
  %s3 = inlined_call_operand.<no memory space> [shape: f32[1], index: 3, kind: input, shape index: {}]
  %s4 = inlined_call_operand.vmem [shape: f32[2,256,16], index: 4, kind: output, shape index: {}]
  %s5 = sld [smem:[#allocation0]]
  $region49: #{upsample_block_forward.1} parent=0
    _
  %s7 = ssub.s32 1, %s5
  %s8 = scalar_select 0, %s7, %s5
  %9 = sst [smem:[#allocation2]] %s3
  loop: start=0, step=1, limit=4
  $region2: #{upsample_block_forward.1} parent=0 // loop_pre_header
    _
  $region3: #{upsample_block_forward.1} parent=0 // loop_header
    %s11 = sphi 0, %s15
    %p12 = scmp.ge.s32.totalorder %s11, 4
    %s21 = sphi 0, %s23
    %s24 = sphi 0, %s21
    %s25 = sphi 0, %s24
    %s41 = sphi 0, %s25
    %s45 = sphi 0, %s45
    %s47 = sphi 0, %s45
    %s48 = sphi 0, %s47
    %s62 = sphi 0, %s48
    %s66 = sphi 0, %s66
    %s68 = sphi 0, %s66
    %s69 = sphi 0, %s68
    %s83 = sphi 0, %s69
    %s87 = sphi 0, %s87
    %s89 = sphi 0, %s87
    %s90 = sphi 0, %s89
    %s104 = sphi 0, %s90
    %s110 = sphi 0, %s112
    %s113 = sphi 0, %s110
    %s114 = sphi 0, %s113
    %s130 = sphi 0, %s114
  $region4: #{upsample_block_forward.1} parent=0 // loop_header_branch
    %14 = sbr.rel (%p12) target = $region8
  $region5: #{upsample_block_forward.1} parent=0 // loop_body
    %s16 = ssub.s32 %s11, 1
    %s17 = ssub.s32 %s11, 2
    %s18 = sadd.s32 %s11, 1
    %s19 = ssub.s32 %s11, %s18
    %p20 = scmp.eq.s32.totalorder %s19, 0
    %s22 = sadd.s32 %s21, 1
    %s23 = scalar_select %p20, %s21, %s22
    %p26 = pneg %p20
    %p27 = scmp.eq.s32.totalorder %s11, 1
    %p28 = por %p26, %p27
    %p29 = scmp.ne.s32.totalorder %s21, %s24
    %p30 = scmp.eq.s32.totalorder %s11, 0
    %p31 = por %p29, %p30
    %p32 = scmp.ne.s32.totalorder %s21, %s24
    %p33 = scmp.eq.s32.totalorder %s16, 1
    %p34 = por %p32, %p33
    %p35 = scmp.ne.s32.totalorder %s24, %s25
    %p36 = scmp.eq.s32.totalorder %s16, 0
    %p37 = por %p35, %p36
    %p38 = scmp.ne.s32.totalorder %s24, %s25
    %p39 = scmp.eq.s32.totalorder %s17, 1
    %p40 = por %p38, %p39
    %p42 = scmp.ne.s32.totalorder %s25, %s41
    %p43 = scmp.eq.s32.totalorder %s17, 0
    %p44 = por %p42, %p43
    %s46 = sadd.s32 %s45, 1
    %p49 = scmp.eq.s32.totalorder %s11, 1
    %p50 = scmp.ne.s32.totalorder %s45, %s47
    %p51 = scmp.eq.s32.totalorder %s11, 0
    %p52 = por %p50, %p51
    %p53 = scmp.ne.s32.totalorder %s45, %s47
    %p54 = scmp.eq.s32.totalorder %s16, 1
    %p55 = por %p53, %p54
    %p56 = scmp.ne.s32.totalorder %s47, %s48
    %p57 = scmp.eq.s32.totalorder %s16, 0
    %p58 = por %p56, %p57
    %p59 = scmp.ne.s32.totalorder %s47, %s48
    %p60 = scmp.eq.s32.totalorder %s17, 1
    %p61 = por %p59, %p60
    %p63 = scmp.ne.s32.totalorder %s48, %s62
    %p64 = scmp.eq.s32.totalorder %s17, 0
    %p65 = por %p63, %p64
    %s67 = sadd.s32 %s66, 1
    %p70 = scmp.eq.s32.totalorder %s11, 1
    %p71 = scmp.ne.s32.totalorder %s66, %s68
    %p72 = scmp.eq.s32.totalorder %s11, 0
    %p73 = por %p71, %p72
    %p74 = scmp.ne.s32.totalorder %s66, %s68
    %p75 = scmp.eq.s32.totalorder %s16, 1
    %p76 = por %p74, %p75
    %p77 = scmp.ne.s32.totalorder %s68, %s69
    %p78 = scmp.eq.s32.totalorder %s16, 0
    %p79 = por %p77, %p78
    %p80 = scmp.ne.s32.totalorder %s68, %s69
    %p81 = scmp.eq.s32.totalorder %s17, 1
    %p82 = por %p80, %p81
    %p84 = scmp.ne.s32.totalorder %s69, %s83
    %p85 = scmp.eq.s32.totalorder %s17, 0
    %p86 = por %p84, %p85
    %s88 = sadd.s32 %s87, 1
    %p91 = scmp.eq.s32.totalorder %s11, 1
    %p92 = scmp.ne.s32.totalorder %s87, %s89
    %p93 = scmp.eq.s32.totalorder %s11, 0
    %p94 = por %p92, %p93
    %p95 = scmp.ne.s32.totalorder %s87, %s89
    %p96 = scmp.eq.s32.totalorder %s16, 1
    %p97 = por %p95, %p96
    %p98 = scmp.ne.s32.totalorder %s89, %s90
    %p99 = scmp.eq.s32.totalorder %s16, 0
    %p100 = por %p98, %p99
    %p101 = scmp.ne.s32.totalorder %s89, %s90
    %p102 = scmp.eq.s32.totalorder %s17, 1
    %p103 = por %p101, %p102
    %p105 = scmp.ne.s32.totalorder %s90, %s104
    %p106 = scmp.eq.s32.totalorder %s17, 0
    %p107 = por %p105, %p106
    %s108 = ssub.s32 %s11, %s18
    %p109 = scmp.eq.s32.totalorder %s108, 0
    %s111 = sadd.s32 %s110, 1
    %s112 = scalar_select %p109, %s110, %s111
    %p115 = pneg %p109
    %p116 = scmp.eq.s32.totalorder %s11, 1
    %p117 = por %p115, %p116
    %p118 = scmp.ne.s32.totalorder %s110, %s113
    %p119 = scmp.eq.s32.totalorder %s11, 0
    %p120 = por %p118, %p119
    %p121 = scmp.ne.s32.totalorder %s110, %s113
    %p122 = scmp.eq.s32.totalorder %s16, 1
    %p123 = por %p121, %p122
    %p124 = scmp.ne.s32.totalorder %s113, %s114
    %p125 = scmp.eq.s32.totalorder %s16, 0
    %p126 = por %p124, %p125
    %p127 = scmp.ne.s32.totalorder %s113, %s114
    %p128 = scmp.eq.s32.totalorder %s17, 1
    %p129 = por %p127, %p128
    %p131 = scmp.ne.s32.totalorder %s114, %s130
    %p132 = scmp.eq.s32.totalorder %s17, 0
    %p133 = por %p131, %p132
    %p134 = scmp.le.s32.totalorder 1, %s11
    %p135 = scmp.lt.s32.totalorder %s11, 3
    %p136 = pnand %p134, %p135
    %p137 = pneg %p136
    // Predicated region
    $region9: #{upsample_block_forward.1} parent=5 // pred_check
      _
    $region10: #{upsample_block_forward.1} parent=5 // pred_check_branch
      %139 = sbr.rel (%p136) target = $region12
    $region11: #{upsample_block_forward.1} parent=5 // pred_region
      %s140 = ssub.s32 %s11, 1
      // Predicated region
      $region13: #{upsample_block_forward.1} parent=11 // pred_check
        %p141 = pneg %p58
      $region14: #{upsample_block_forward.1} parent=11 // pred_check_branch
        %143 = sbr.rel (%p141) target = $region16
      $region15: #{upsample_block_forward.1} parent=11 // pred_region
        _
      $region16: #{upsample_block_forward.1} parent=11 // pred_fallthru
        _
      // Predicated region
      $region17: #{upsample_block_forward.1} parent=11 // pred_check
        %p144 = pneg %p79
      $region18: #{upsample_block_forward.1} parent=11 // pred_check_branch
        %146 = sbr.rel (%p144) target = $region20
      $region19: #{upsample_block_forward.1} parent=11 // pred_region
        _
      $region20: #{upsample_block_forward.1} parent=11 // pred_fallthru
        _
      // Predicated region
      $region21: #{upsample_block_forward.1} parent=11 // pred_check
        %p147 = pneg %p100
      $region22: #{upsample_block_forward.1} parent=11 // pred_check_branch
        %149 = sbr.rel (%p147) target = $region24
      $region23: #{upsample_block_forward.1} parent=11 // pred_region
        _
      $region24: #{upsample_block_forward.1} parent=11 // pred_fallthru
        _
    $region12: #{upsample_block_forward.1} parent=5 // pred_fallthru
      _
    %p150 = scmp.lt.s32.totalorder %s11, 2
    // Predicated region
    $region25: #{upsample_block_forward.1} parent=5 // pred_check
      %p151 = pneg %p150
    $region26: #{upsample_block_forward.1} parent=5 // pred_check_branch
      %153 = sbr.rel (%p151) target = $region28
    $region27: #{upsample_block_forward.1} parent=5 // pred_region
      // Predicated region
      $region29: #{upsample_block_forward.1} parent=27 // pred_check
        %p154 = pneg %p31
      $region30: #{upsample_block_forward.1} parent=27 // pred_check_branch
        %156 = sbr.rel (%p154) target = $region32
      $region31: #{upsample_block_forward.1} parent=27 // pred_region
        %p157 = scmp.lt.s32.totalorder %s11, 1
        %s158 = scalar_select %p157, %s11, 1
        %s159 = smul.addr %s158, 54
        %s160 = smul.addr %s159, 8
        %s161 = scalar_lea.vmem %s0, %s160
      $region32: #{upsample_block_forward.1} parent=27 // pred_fallthru
        _
    $region28: #{upsample_block_forward.1} parent=5 // pred_fallthru
      _
    %p162 = scmp.le.s32.totalorder 1, %s11
    %p163 = scmp.lt.s32.totalorder %s11, 3
    %p164 = pnand %p162, %p163
    %p165 = pneg %p164
    // Predicated region
    $region33: #{upsample_block_forward.1} parent=5 // pred_check
      _
    $region34: #{upsample_block_forward.1} parent=5 // pred_check_branch
      %167 = sbr.rel (%p164) target = $region36
    $region35: #{upsample_block_forward.1} parent=5 // pred_region
      %s168 = ssub.s32 %s11, 1
      %p169 = scmp.lt.s32.totalorder %s16, 1
      %s170 = scalar_select %p169, %s16, 1
      %s171 = smul.addr %s170, 54
      %s172 = smul.addr %s171, 8
      %s173 = scalar_lea.vmem %s0, %s172
      %p174 = pneg %p37
      %p175 = pneg %p34
      %p176 = pneg %p58
      %p177 = pneg %p55
      %p178 = pneg %p79
      %p179 = pneg %p76
      %p180 = pneg %p100
      %p181 = pneg %p97
      %p182 = pneg %p126
      %p183 = pneg %p123
      %p184 = scmp.lt.s32.totalorder %s16, 1
      %s185 = scalar_select %p184, %s16, 1
      %s186 = smul.addr %s185, 32
      %s187 = smul.addr %s186, 8
      %s188 = scalar_lea.vmem %s4, %s187
      %p189 = scmp.lt.s32.totalorder %s16, 1
      %s190 = scalar_select %p189, %s16, 1
      %s191 = smul.addr %s190, 54
      %s192 = smul.addr %s191, 8
      %s193 = scalar_lea.vmem %s0, %s192
      %p194 = scmp.lt.s32.totalorder %s16, 1
      %s195 = scalar_select %p194, %s16, 1
      %s196 = smul.addr %s195, 32
      %s197 = smul.addr %s196, 8
      %s198 = scalar_lea.vmem %s4, %s197
      %v200 = vld [vmem:[%s193] sm:$0xff]
      %v201 = vld [vmem:[%s193 + $0x8] sm:$0xff]
      %v202 = vld [vmem:[%s193 + $0x10] sm:$0x3]
      %v203 = vld [vmem:[%s193 + $0x18] sm:$0xff]
      %v204 = vld [vmem:[%s193 + $0x20] sm:$0xff]
      %v205 = vld [vmem:[%s193 + $0x28] sm:$0x3]
      %v206 = vld [vmem:[%s193 + $0x30] sm:$0xff]
      %v207 = vld [vmem:[%s193 + $0x38] sm:$0xff]
      %v208 = vld [vmem:[%s193 + $0x40] sm:$0x3]
      %v209 = vld [vmem:[%s193 + $0x48] sm:$0xff]
      %v210 = vld [vmem:[%s193 + $0x50] sm:$0xff]
      %v211 = vld [vmem:[%s193 + $0x58] sm:$0x3]
      %v212 = vld [vmem:[%s193 + $0x60] sm:$0xff]
      %v213 = vld [vmem:[%s193 + $0x68] sm:$0xff]
      %v214 = vld [vmem:[%s193 + $0x70] sm:$0x3]
      %v215 = vld [vmem:[%s193 + $0x78] sm:$0xff]
      %v216 = vld [vmem:[%s193 + $0x80] sm:$0xff]
      %v217 = vld [vmem:[%s193 + $0x88] sm:$0x3]
      %v218 = vld [vmem:[%s193 + $0x90] sm:$0xff]
      %v219 = vld [vmem:[%s193 + $0x98] sm:$0xff]
      %v220 = vld [vmem:[%s193 + $0xa0] sm:$0x3]
      %v221 = vld [vmem:[%s193 + $0xa8] sm:$0xff]
      %v222 = vld [vmem:[%s193 + $0xb0] sm:$0xff]
      %v223 = vld [vmem:[%s193 + $0xb8] sm:$0x3]
      %v224 = vld [vmem:[%s193 + $0xc0] sm:$0xff]
      %v225 = vld [vmem:[%s193 + $0xc8] sm:$0xff]
      %v226 = vld [vmem:[%s193 + $0xd0] sm:$0x3]
      %v227 = vld [vmem:[%s193 + $0xd8] sm:$0xff]
      %v228 = vld [vmem:[%s193 + $0xe0] sm:$0xff]
      %v229 = vld [vmem:[%s193 + $0xe8] sm:$0x3]
      %v230 = vld [vmem:[%s193 + $0xf0] sm:$0xff]
      %v231 = vld [vmem:[%s193 + $0xf8] sm:$0xff]
      %v232 = vld [vmem:[%s193 + $0x100] sm:$0x3]
      %v233 = vld [vmem:[%s193 + $0x108] sm:$0xff]
      %v234 = vld [vmem:[%s193 + $0x110] sm:$0xff]
      %v235 = vld [vmem:[%s193 + $0x118] sm:$0x3]
      %v236 = vld [vmem:[%s193 + $0x120] sm:$0xff]
      %v237 = vld [vmem:[%s193 + $0x128] sm:$0xff]
      %v238 = vld [vmem:[%s193 + $0x130] sm:$0x3]
      %v239 = vld [vmem:[%s193 + $0x138] sm:$0xff]
      %v240 = vld [vmem:[%s193 + $0x140] sm:$0xff]
      %v241 = vld [vmem:[%s193 + $0x148] sm:$0x3]
      %v242 = vld [vmem:[%s193 + $0x150] sm:$0xff]
      %v243 = vld [vmem:[%s193 + $0x158] sm:$0xff]
      %v244 = vld [vmem:[%s193 + $0x160] sm:$0x3]
      %v245 = vld [vmem:[%s193 + $0x168] sm:$0xff]
      %v246 = vld [vmem:[%s193 + $0x170] sm:$0xff]
      %v247 = vld [vmem:[%s193 + $0x178] sm:$0x3]
      %v248 = vld [vmem:[%s193 + $0x180] sm:$0xff]
      %v249 = vld [vmem:[%s193 + $0x188] sm:$0xff]
      %v250 = vld [vmem:[%s193 + $0x190] sm:$0x3]
      %v251 = vld [vmem:[%s193 + $0x198] sm:$0xff]
      %v252 = vld [vmem:[%s193 + $0x1a0] sm:$0xff]
      %v253 = vld [vmem:[%s193 + $0x1a8] sm:$0x3]
      %v254 = vpack.c.bf16 %v201, %v200
      %v255 = vpack.c.bf16 %v204, %v203
      %v256 = vpack.c.bf16 %v207, %v206
      %v257 = vpack.c.bf16 %v210, %v209
      %v258 = vpack.c.bf16 %v213, %v212
      %v259 = vpack.c.bf16 %v216, %v215
      %v260 = vpack.c.bf16 %v219, %v218
      %v261 = vpack.c.bf16 %v222, %v221
      %v262 = vpack.c.bf16 %v225, %v224
      %v263 = vpack.c.bf16 %v228, %v227
      %v264 = vpack.c.bf16 %v231, %v230
      %v265 = vpack.c.bf16 %v234, %v233
      %v266 = vpack.c.bf16 %v237, %v236
      %v267 = vpack.c.bf16 %v240, %v239
      %v268 = vpack.c.bf16 %v243, %v242
      %v269 = vpack.c.bf16 %v246, %v245
      %v270 = vld [vmem:[%s1] sm:$0x3]
      %vm319 = vcmask 1046528
      %v320 = vrot.slane %v200, 1
      %v321 = vrot.slane %v201, 1
      %v322 = vsel %vm319, %v320, %v321
      %v323 = vrot.slane %v202, 1
      %v324 = vsel %vm319, %v321, %v323
      %v325 = vrot.slane %v203, 1
      %v326 = vrot.slane %v204, 1
      %v327 = vsel %vm319, %v325, %v326
      %v328 = vrot.slane %v205, 1
      %v329 = vsel %vm319, %v326, %v328
      %v330 = vrot.slane %v206, 1
      %v331 = vrot.slane %v207, 1
      %v332 = vsel %vm319, %v330, %v331
      %v333 = vrot.slane %v208, 1
      %v334 = vsel %vm319, %v331, %v333
      %v335 = vrot.slane %v209, 1
      %v336 = vrot.slane %v210, 1
      %v337 = vsel %vm319, %v335, %v336
      %v338 = vrot.slane %v211, 1
      %v339 = vsel %vm319, %v336, %v338
      %v340 = vrot.slane %v212, 1
      %v341 = vrot.slane %v213, 1
      %v342 = vsel %vm319, %v340, %v341
      %v343 = vrot.slane %v214, 1
      %v344 = vsel %vm319, %v341, %v343
      %v345 = vrot.slane %v215, 1
      %v346 = vrot.slane %v216, 1
      %v347 = vsel %vm319, %v345, %v346
      %v348 = vrot.slane %v217, 1
      %v349 = vsel %vm319, %v346, %v348
      %v350 = vrot.slane %v218, 1
      %v351 = vrot.slane %v219, 1
      %v352 = vsel %vm319, %v350, %v351
      %v353 = vrot.slane %v220, 1
      %v354 = vsel %vm319, %v351, %v353
      %v355 = vrot.slane %v221, 1
      %v356 = vrot.slane %v222, 1
      %v357 = vsel %vm319, %v355, %v356
      %v358 = vrot.slane %v223, 1
      %v359 = vsel %vm319, %v356, %v358
      %v360 = vrot.slane %v224, 1
      %v361 = vrot.slane %v225, 1
      %v362 = vsel %vm319, %v360, %v361
      %v363 = vrot.slane %v226, 1
      %v364 = vsel %vm319, %v361, %v363
      %v365 = vrot.slane %v227, 1
      %v366 = vrot.slane %v228, 1
      %v367 = vsel %vm319, %v365, %v366
      %v368 = vrot.slane %v229, 1
      %v369 = vsel %vm319, %v366, %v368
      %v370 = vrot.slane %v230, 1
      %v371 = vrot.slane %v231, 1
      %v372 = vsel %vm319, %v370, %v371
      %v373 = vrot.slane %v232, 1
      %v374 = vsel %vm319, %v371, %v373
      %v375 = vrot.slane %v233, 1
      %v376 = vrot.slane %v234, 1
      %v377 = vsel %vm319, %v375, %v376
      %v378 = vrot.slane %v235, 1
      %v379 = vsel %vm319, %v376, %v378
      %v380 = vrot.slane %v236, 1
      %v381 = vrot.slane %v237, 1
      %v382 = vsel %vm319, %v380, %v381
      %v383 = vrot.slane %v238, 1
      %v384 = vsel %vm319, %v381, %v383
      %v385 = vrot.slane %v239, 1
      %v386 = vrot.slane %v240, 1
      %v387 = vsel %vm319, %v385, %v386
      %v388 = vrot.slane %v241, 1
      %v389 = vsel %vm319, %v386, %v388
      %v390 = vrot.slane %v242, 1
      %v391 = vrot.slane %v243, 1
      %v392 = vsel %vm319, %v390, %v391
      %v393 = vrot.slane %v244, 1
      %v394 = vsel %vm319, %v391, %v393
      %v395 = vrot.slane %v245, 1
      %v396 = vrot.slane %v246, 1
      %v397 = vsel %vm319, %v395, %v396
      %v398 = vrot.slane %v247, 1
      %v399 = vsel %vm319, %v396, %v398
      %v432 = vpack.c.bf16 %v324, %v322
      %v433 = vpack.c.bf16 %v329, %v327
      %v434 = vpack.c.bf16 %v334, %v332
      %v435 = vpack.c.bf16 %v339, %v337
      %v436 = vpack.c.bf16 %v344, %v342
      %v437 = vpack.c.bf16 %v349, %v347
      %v438 = vpack.c.bf16 %v354, %v352
      %v439 = vpack.c.bf16 %v359, %v357
      %v440 = vpack.c.bf16 %v364, %v362
      %v441 = vpack.c.bf16 %v369, %v367
      %v442 = vpack.c.bf16 %v374, %v372
      %v443 = vpack.c.bf16 %v379, %v377
      %v444 = vpack.c.bf16 %v384, %v382
      %v445 = vpack.c.bf16 %v389, %v387
      %v446 = vpack.c.bf16 %v394, %v392
      %v447 = vpack.c.bf16 %v399, %v397
      %s448 = scalar_lea.vmem %s1, 2
      %v449 = vld [vmem:[%s448] sm:$0x3]
      %vm450 = vcmask 31744
      %v452 = vsel %vm450, %v432, 0
      %v455 = vsel %vm450, %v433, 0
      %v458 = vsel %vm450, %v434, 0
      %v461 = vsel %vm450, %v435, 0
      %v464 = vsel %vm450, %v436, 0
      %v467 = vsel %vm450, %v437, 0
      %v470 = vsel %vm450, %v438, 0
      %v473 = vsel %vm450, %v439, 0
      %v476 = vsel %vm450, %v440, 0
      %v479 = vsel %vm450, %v441, 0
      %v482 = vsel %vm450, %v442, 0
      %v485 = vsel %vm450, %v443, 0
      %v488 = vsel %vm450, %v444, 0
      %v491 = vsel %vm450, %v445, 0
      %v494 = vsel %vm450, %v446, 0
      %v497 = vsel %vm450, %v447, 0
      %vm499 = vcmask 1041408
      %v501 = vsel %vm499, %v449, 0
      %503 = vmatprep.subr.bf16.mxu0 0
      %504 = vmatpush1.bf16.msra.mxu0 %v501
      %505 = vmatprep.subr.bf16.mxu0 0
      %506 = vmatpush1.bf16.msra.mxu0 0
      %507 = vmatprep.subr.bf16.mxu0 0
      %508 = vmatpush1.bf16.msra.mxu0 0
      %509 = vmatprep.subr.bf16.mxu0 0
      %510 = vmatpush1.bf16.msra.mxu0 0
      %511 = vmatprep.subr.bf16.mxu0 0
      %512 = vmatpush1.bf16.msra.mxu0 0
      %513 = vmatprep.subr.bf16.mxu0 0
      %514 = vmatpush1.bf16.msra.mxu0 0
      %515 = vmatprep.subr.bf16.mxu0 0
      %516 = vmatpush1.bf16.msra.mxu0 0
      %517 = vmatprep.subr.bf16.mxu0 0
      %518 = vmatpush1.bf16.msra.mxu0 0
      %519 = vmatprep.subr.bf16.mxu0 0
      %520 = vmatpush1.bf16.msra.mxu0 0
      %521 = vmatprep.subr.bf16.mxu0 0
      %522 = vmatpush1.bf16.msra.mxu0 0
      %523 = vmatprep.subr.bf16.mxu0 0
      %524 = vmatpush1.bf16.msra.mxu0 0
      %525 = vmatprep.subr.bf16.mxu0 0
      %526 = vmatpush1.bf16.msra.mxu0 0
      %527 = vmatprep.subr.bf16.mxu0 0
      %528 = vmatpush1.bf16.msra.mxu0 0
      %529 = vmatprep.subr.bf16.mxu0 0
      %530 = vmatpush1.bf16.msra.mxu0 0
      %531 = vmatprep.subr.bf16.mxu0 0
      %532 = vmatpush1.bf16.msra.mxu0 0
      %533 = vmatprep.subr.bf16.mxu0 0
      %534 = vmatpush1.bf16.msra.mxu0 0
      %535 = vmatprep.mubr.bf16.mxu0 0
      %536 = vmatmul.mubr.bf16.gmra.mrb[0].mxu0 %v452
      %v537 = vpop.f32.mrb[0].mxu0
      %v538 = vadd.f32 0.0, %v537
      %v539 = vpop.f32.mrb[0].mxu0
      %v540 = vpop.f32.mrb[0].mxu0
      %v541 = vadd.f32 0.0, %v540
      %v542 = vpop.f32.mrb[0].mxu0
      %543 = vmatprep.mubr.bf16.mxu0 0
      %544 = vmatmul.mubr.bf16.gmra.mrb[0].mxu0 %v455
      %v545 = vpop.f32.mrb[0].mxu0
      %v546 = vadd.f32 0.0, %v545
      %v547 = vpop.f32.mrb[0].mxu0
      %v548 = vpop.f32.mrb[0].mxu0
      %v549 = vadd.f32 0.0, %v548
      %v550 = vpop.f32.mrb[0].mxu0
      %551 = vmatprep.mubr.bf16.mxu0 0
      %552 = vmatmul.mubr.bf16.gmra.mrb[0].mxu0 %v458
      %v553 = vpop.f32.mrb[0].mxu0
      %v554 = vadd.f32 0.0, %v553
      %v555 = vpop.f32.mrb[0].mxu0
      %v556 = vpop.f32.mrb[0].mxu0
      %v557 = vadd.f32 0.0, %v556
      %v558 = vpop.f32.mrb[0].mxu0
      %559 = vmatprep.mubr.bf16.mxu0 0
      %560 = vmatmul.mubr.bf16.gmra.mrb[0].mxu0 %v461
      %v561 = vpop.f32.mrb[0].mxu0
      %v562 = vadd.f32 0.0, %v561
      %v563 = vpop.f32.mrb[0].mxu0
      %v564 = vpop.f32.mrb[0].mxu0
      %v565 = vadd.f32 0.0, %v564
      %v566 = vpop.f32.mrb[0].mxu0
      %567 = vmatprep.mubr.bf16.mxu0 0
      %568 = vmatmul.mubr.bf16.gmra.mrb[0].mxu0 %v464
      %v569 = vpop.f32.mrb[0].mxu0
      %v570 = vadd.f32 0.0, %v569
      %v571 = vpop.f32.mrb[0].mxu0
      %v572 = vpop.f32.mrb[0].mxu0
      %v573 = vadd.f32 0.0, %v572
      %v574 = vpop.f32.mrb[0].mxu0
      %575 = vmatprep.mubr.bf16.mxu0 0
      %576 = vmatmul.mubr.bf16.gmra.mrb[0].mxu0 %v467
      %v577 = vpop.f32.mrb[0].mxu0
      %v578 = vadd.f32 0.0, %v577
      %v579 = vpop.f32.mrb[0].mxu0
      %v580 = vpop.f32.mrb[0].mxu0
      %v581 = vadd.f32 0.0, %v580
      %v582 = vpop.f32.mrb[0].mxu0
      %583 = vmatprep.mubr.bf16.mxu0 0
      %584 = vmatmul.mubr.bf16.gmra.mrb[0].mxu0 %v470
      %v585 = vpop.f32.mrb[0].mxu0
      %v586 = vadd.f32 0.0, %v585
      %v587 = vpop.f32.mrb[0].mxu0
      %v588 = vpop.f32.mrb[0].mxu0
      %v589 = vadd.f32 0.0, %v588
      %v590 = vpop.f32.mrb[0].mxu0
      %591 = vmatprep.mubr.bf16.mxu0 0
      %592 = vmatmul.mubr.bf16.gmra.mrb[0].mxu0 %v473
      %v593 = vpop.f32.mrb[0].mxu0
      %v594 = vadd.f32 0.0, %v593
      %v595 = vpop.f32.mrb[0].mxu0
      %v596 = vpop.f32.mrb[0].mxu0
      %v597 = vadd.f32 0.0, %v596
      %v598 = vpop.f32.mrb[0].mxu0
      %599 = vmatprep.mubr.bf16.mxu0 0
      %600 = vmatmul.mubr.bf16.gmra.mrb[0].mxu0 %v476
      %v601 = vpop.f32.mrb[0].mxu0
      %v602 = vadd.f32 0.0, %v601
      %v603 = vpop.f32.mrb[0].mxu0
      %v604 = vpop.f32.mrb[0].mxu0
      %v605 = vadd.f32 0.0, %v604
      %v606 = vpop.f32.mrb[0].mxu0
      %607 = vmatprep.mubr.bf16.mxu0 0
      %608 = vmatmul.mubr.bf16.gmra.mrb[0].mxu0 %v479
      %v609 = vpop.f32.mrb[0].mxu0
      %v610 = vadd.f32 0.0, %v609
      %v611 = vpop.f32.mrb[0].mxu0
      %v612 = vpop.f32.mrb[0].mxu0
      %v613 = vadd.f32 0.0, %v612
      %v614 = vpop.f32.mrb[0].mxu0
      %615 = vmatprep.mubr.bf16.mxu0 0
      %616 = vmatmul.mubr.bf16.gmra.mrb[0].mxu0 %v482
      %v617 = vpop.f32.mrb[0].mxu0
      %v618 = vadd.f32 0.0, %v617
      %v619 = vpop.f32.mrb[0].mxu0
      %v620 = vpop.f32.mrb[0].mxu0
      %v621 = vadd.f32 0.0, %v620
      %v622 = vpop.f32.mrb[0].mxu0
      %623 = vmatprep.mubr.bf16.mxu0 0
      %624 = vmatmul.mubr.bf16.gmra.mrb[0].mxu0 %v485
      %v625 = vpop.f32.mrb[0].mxu0
      %v626 = vadd.f32 0.0, %v625
      %v627 = vpop.f32.mrb[0].mxu0
      %v628 = vpop.f32.mrb[0].mxu0
      %v629 = vadd.f32 0.0, %v628
      %v630 = vpop.f32.mrb[0].mxu0
      %631 = vmatprep.mubr.bf16.mxu0 0
      %632 = vmatmul.mubr.bf16.gmra.mrb[0].mxu0 %v488
      %v633 = vpop.f32.mrb[0].mxu0
      %v634 = vadd.f32 0.0, %v633
      %v635 = vpop.f32.mrb[0].mxu0
      %v636 = vpop.f32.mrb[0].mxu0
      %v637 = vadd.f32 0.0, %v636
      %v638 = vpop.f32.mrb[0].mxu0
      %639 = vmatprep.mubr.bf16.mxu0 0
      %640 = vmatmul.mubr.bf16.gmra.mrb[0].mxu0 %v491
      %v641 = vpop.f32.mrb[0].mxu0
      %v642 = vadd.f32 0.0, %v641
      %v643 = vpop.f32.mrb[0].mxu0
      %v644 = vpop.f32.mrb[0].mxu0
      %v645 = vadd.f32 0.0, %v644
      %v646 = vpop.f32.mrb[0].mxu0
      %647 = vmatprep.mubr.bf16.mxu0 0
      %648 = vmatmul.mubr.bf16.gmra.mrb[0].mxu0 %v494
      %v649 = vpop.f32.mrb[0].mxu0
      %v650 = vadd.f32 0.0, %v649
      %v651 = vpop.f32.mrb[0].mxu0
      %v652 = vpop.f32.mrb[0].mxu0
      %v653 = vadd.f32 0.0, %v652
      %v654 = vpop.f32.mrb[0].mxu0
      %655 = vmatprep.mubr.bf16.mxu0 0
      %656 = vmatmul.mubr.bf16.gmra.mrb[0].mxu0 %v497
      %v657 = vpop.f32.mrb[0].mxu0
      %v658 = vadd.f32 0.0, %v657
      %v659 = vpop.f32.mrb[0].mxu0
      %v660 = vpop.f32.mrb[0].mxu0
      %v661 = vadd.f32 0.0, %v660
      %v662 = vpop.f32.mrb[0].mxu0
      %663 = vdwg.mxu0
      %v665 = vsel %vm450, %v254, 0
      %v668 = vsel %vm450, %v255, 0
      %v671 = vsel %vm450, %v256, 0
      %v674 = vsel %vm450, %v257, 0
      %v677 = vsel %vm450, %v258, 0
      %v680 = vsel %vm450, %v259, 0
      %v683 = vsel %vm450, %v260, 0
      %v686 = vsel %vm450, %v261, 0
      %v689 = vsel %vm450, %v262, 0
      %v692 = vsel %vm450, %v263, 0
      %v695 = vsel %vm450, %v264, 0
      %v698 = vsel %vm450, %v265, 0
      %v701 = vsel %vm450, %v266, 0
      %v704 = vsel %vm450, %v267, 0
      %v707 = vsel %vm450, %v268, 0
      %v710 = vsel %vm450, %v269, 0
      %v713 = vsel %vm499, %v270, 0
      %715 = vmatprep.subr.bf16.mxu0 0
      %716 = vmatpush1.bf16.msra.mxu0 %v713
      %717 = vmatprep.subr.bf16.mxu0 0
      %718 = vmatpush1.bf16.msra.mxu0 0
      %719 = vmatprep.subr.bf16.mxu0 0
      %720 = vmatpush1.bf16.msra.mxu0 0
      %721 = vmatprep.subr.bf16.mxu0 0
      %722 = vmatpush1.bf16.msra.mxu0 0
      %723 = vmatprep.subr.bf16.mxu0 0
      %724 = vmatpush1.bf16.msra.mxu0 0
      %725 = vmatprep.subr.bf16.mxu0 0
      %726 = vmatpush1.bf16.msra.mxu0 0
      %727 = vmatprep.subr.bf16.mxu0 0
      %728 = vmatpush1.bf16.msra.mxu0 0
      %729 = vmatprep.subr.bf16.mxu0 0
      %730 = vmatpush1.bf16.msra.mxu0 0
      %731 = vmatprep.subr.bf16.mxu0 0
      %732 = vmatpush1.bf16.msra.mxu0 0
      %733 = vmatprep.subr.bf16.mxu0 0
      %734 = vmatpush1.bf16.msra.mxu0 0
      %735 = vmatprep.subr.bf16.mxu0 0
      %736 = vmatpush1.bf16.msra.mxu0 0
      %737 = vmatprep.subr.bf16.mxu0 0
      %738 = vmatpush1.bf16.msra.mxu0 0
      %739 = vmatprep.subr.bf16.mxu0 0
      %740 = vmatpush1.bf16.msra.mxu0 0
      %741 = vmatprep.subr.bf16.mxu0 0
      %742 = vmatpush1.bf16.msra.mxu0 0
      %743 = vmatprep.subr.bf16.mxu0 0
      %744 = vmatpush1.bf16.msra.mxu0 0
      %745 = vmatprep.subr.bf16.mxu0 0
      %746 = vmatpush1.bf16.msra.mxu0 0
      %747 = vmatprep.mubr.bf16.mxu0 0
      %748 = vmatmul.mubr.bf16.gmra.mrb[0].mxu0 %v665
      %v749 = vpop.f32.mrb[0].mxu0
      %v750 = vadd.f32 %v538, %v749
      %v751 = vpop.f32.mrb[0].mxu0
      %v752 = vpop.f32.mrb[0].mxu0
      %v753 = vadd.f32 %v541, %v752
      %v754 = vpop.f32.mrb[0].mxu0
      %755 = vmatprep.mubr.bf16.mxu0 0
      %756 = vmatmul.mubr.bf16.gmra.mrb[0].mxu0 %v668
      %v757 = vpop.f32.mrb[0].mxu0
      %v758 = vadd.f32 %v546, %v757
      %v759 = vpop.f32.mrb[0].mxu0
      %v760 = vpop.f32.mrb[0].mxu0
      %v761 = vadd.f32 %v549, %v760
      %v762 = vpop.f32.mrb[0].mxu0
      %763 = vmatprep.mubr.bf16.mxu0 0
      %764 = vmatmul.mubr.bf16.gmra.mrb[0].mxu0 %v671
      %v765 = vpop.f32.mrb[0].mxu0
      %v766 = vadd.f32 %v554, %v765
      %v767 = vpop.f32.mrb[0].mxu0
      %v768 = vpop.f32.mrb[0].mxu0
      %v769 = vadd.f32 %v557, %v768
      %v770 = vpop.f32.mrb[0].mxu0
      %771 = vmatprep.mubr.bf16.mxu0 0
      %772 = vmatmul.mubr.bf16.gmra.mrb[0].mxu0 %v674
      %v773 = vpop.f32.mrb[0].mxu0
      %v774 = vadd.f32 %v562, %v773
      %v775 = vpop.f32.mrb[0].mxu0
      %v776 = vpop.f32.mrb[0].mxu0
      %v777 = vadd.f32 %v565, %v776
      %v778 = vpop.f32.mrb[0].mxu0
      %779 = vmatprep.mubr.bf16.mxu0 0
      %780 = vmatmul.mubr.bf16.gmra.mrb[0].mxu0 %v677
      %v781 = vpop.f32.mrb[0].mxu0
      %v782 = vadd.f32 %v570, %v781
      %v783 = vpop.f32.mrb[0].mxu0
      %v784 = vpop.f32.mrb[0].mxu0
      %v785 = vadd.f32 %v573, %v784
      %v786 = vpop.f32.mrb[0].mxu0
      %787 = vmatprep.mubr.bf16.mxu0 0
      %788 = vmatmul.mubr.bf16.gmra.mrb[0].mxu0 %v680
      %v789 = vpop.f32.mrb[0].mxu0
      %v790 = vadd.f32 %v578, %v789
      %v791 = vpop.f32.mrb[0].mxu0
      %v792 = vpop.f32.mrb[0].mxu0
      %v793 = vadd.f32 %v581, %v792
      %v794 = vpop.f32.mrb[0].mxu0
      %795 = vmatprep.mubr.bf16.mxu0 0
      %796 = vmatmul.mubr.bf16.gmra.mrb[0].mxu0 %v683
      %v797 = vpop.f32.mrb[0].mxu0
      %v798 = vadd.f32 %v586, %v797
      %v799 = vpop.f32.mrb[0].mxu0
      %v800 = vpop.f32.mrb[0].mxu0
      %v801 = vadd.f32 %v589, %v800
      %v802 = vpop.f32.mrb[0].mxu0
      %803 = vmatprep.mubr.bf16.mxu0 0
      %804 = vmatmul.mubr.bf16.gmra.mrb[0].mxu0 %v686
      %v805 = vpop.f32.mrb[0].mxu0
      %v806 = vadd.f32 %v594, %v805
      %v807 = vpop.f32.mrb[0].mxu0
      %v808 = vpop.f32.mrb[0].mxu0
      %v809 = vadd.f32 %v597, %v808
      %v810 = vpop.f32.mrb[0].mxu0
      %811 = vmatprep.mubr.bf16.mxu0 0
      %812 = vmatmul.mubr.bf16.gmra.mrb[0].mxu0 %v689
      %v813 = vpop.f32.mrb[0].mxu0
      %v814 = vadd.f32 %v602, %v813
      %v815 = vpop.f32.mrb[0].mxu0
      %v816 = vpop.f32.mrb[0].mxu0
      %v817 = vadd.f32 %v605, %v816
      %v818 = vpop.f32.mrb[0].mxu0
      %819 = vmatprep.mubr.bf16.mxu0 0
      %820 = vmatmul.mubr.bf16.gmra.mrb[0].mxu0 %v692
      %v821 = vpop.f32.mrb[0].mxu0
      %v822 = vadd.f32 %v610, %v821
      %v823 = vpop.f32.mrb[0].mxu0
      %v824 = vpop.f32.mrb[0].mxu0
      %v825 = vadd.f32 %v613, %v824
      %v826 = vpop.f32.mrb[0].mxu0
      %827 = vmatprep.mubr.bf16.mxu0 0
      %828 = vmatmul.mubr.bf16.gmra.mrb[0].mxu0 %v695
      %v829 = vpop.f32.mrb[0].mxu0
      %v830 = vadd.f32 %v618, %v829
      %v831 = vpop.f32.mrb[0].mxu0
      %v832 = vpop.f32.mrb[0].mxu0
      %v833 = vadd.f32 %v621, %v832
      %v834 = vpop.f32.mrb[0].mxu0
      %835 = vmatprep.mubr.bf16.mxu0 0
      %836 = vmatmul.mubr.bf16.gmra.mrb[0].mxu0 %v698
      %v837 = vpop.f32.mrb[0].mxu0
      %v838 = vadd.f32 %v626, %v837
      %v839 = vpop.f32.mrb[0].mxu0
      %v840 = vpop.f32.mrb[0].mxu0
      %v841 = vadd.f32 %v629, %v840
      %v842 = vpop.f32.mrb[0].mxu0
      %843 = vmatprep.mubr.bf16.mxu0 0
      %844 = vmatmul.mubr.bf16.gmra.mrb[0].mxu0 %v701
      %v845 = vpop.f32.mrb[0].mxu0
      %v846 = vadd.f32 %v634, %v845
      %v847 = vpop.f32.mrb[0].mxu0
      %v848 = vpop.f32.mrb[0].mxu0
      %v849 = vadd.f32 %v637, %v848
      %v850 = vpop.f32.mrb[0].mxu0
      %851 = vmatprep.mubr.bf16.mxu0 0
      %852 = vmatmul.mubr.bf16.gmra.mrb[0].mxu0 %v704
      %v853 = vpop.f32.mrb[0].mxu0
      %v854 = vadd.f32 %v642, %v853
      %v855 = vpop.f32.mrb[0].mxu0
      %v856 = vpop.f32.mrb[0].mxu0
      %v857 = vadd.f32 %v645, %v856
      %v858 = vpop.f32.mrb[0].mxu0
      %859 = vmatprep.mubr.bf16.mxu0 0
      %860 = vmatmul.mubr.bf16.gmra.mrb[0].mxu0 %v707
      %v861 = vpop.f32.mrb[0].mxu0
      %v862 = vadd.f32 %v650, %v861
      %v863 = vpop.f32.mrb[0].mxu0
      %v864 = vpop.f32.mrb[0].mxu0
      %v865 = vadd.f32 %v653, %v864
      %v866 = vpop.f32.mrb[0].mxu0
      %867 = vmatprep.mubr.bf16.mxu0 0
      %868 = vmatmul.mubr.bf16.gmra.mrb[0].mxu0 %v710
      %v869 = vpop.f32.mrb[0].mxu0
      %v870 = vadd.f32 %v658, %v869
      %v871 = vpop.f32.mrb[0].mxu0
      %v872 = vpop.f32.mrb[0].mxu0
      %v873 = vadd.f32 %v661, %v872
      %v874 = vpop.f32.mrb[0].mxu0
      %875 = vdwg.mxu0
      %vm876 = vcmask 1045504
      %v877 = vrot.slane %v200, 2
      %v878 = vrot.slane %v201, 2
      %v879 = vsel %vm876, %v877, %v878
      %v880 = vrot.slane %v202, 2
      %v881 = vsel %vm876, %v878, %v880
      %v882 = vrot.slane %v203, 2
      %v883 = vrot.slane %v204, 2
      %v884 = vsel %vm876, %v882, %v883
      %v885 = vrot.slane %v205, 2
      %v886 = vsel %vm876, %v883, %v885
      %v887 = vrot.slane %v206, 2
      %v888 = vrot.slane %v207, 2
      %v889 = vsel %vm876, %v887, %v888
      %v890 = vrot.slane %v208, 2
      %v891 = vsel %vm876, %v888, %v890
      %v892 = vrot.slane %v209, 2
      %v893 = vrot.slane %v210, 2
      %v894 = vsel %vm876, %v892, %v893
      %v895 = vrot.slane %v211, 2
      %v896 = vsel %vm876, %v893, %v895
      %v897 = vrot.slane %v212, 2
      %v898 = vrot.slane %v213, 2
      %v899 = vsel %vm876, %v897, %v898
      %v900 = vrot.slane %v214, 2
      %v901 = vsel %vm876, %v898, %v900
      %v902 = vrot.slane %v215, 2
      %v903 = vrot.slane %v216, 2
      %v904 = vsel %vm876, %v902, %v903
      %v905 = vrot.slane %v217, 2
      %v906 = vsel %vm876, %v903, %v905
      %v907 = vrot.slane %v218, 2
      %v908 = vrot.slane %v219, 2
      %v909 = vsel %vm876, %v907, %v908
      %v910 = vrot.slane %v220, 2
      %v911 = vsel %vm876, %v908, %v910
      %v912 = vrot.slane %v221, 2
      %v913 = vrot.slane %v222, 2
      %v914 = vsel %vm876, %v912, %v913
      %v915 = vrot.slane %v223, 2
      %v916 = vsel %vm876, %v913, %v915
      %v917 = vrot.slane %v224, 2
      %v918 = vrot.slane %v225, 2
      %v919 = vsel %vm876, %v917, %v918
      %v920 = vrot.slane %v226, 2
      %v921 = vsel %vm876, %v918, %v920
      %v922 = vrot.slane %v227, 2
      %v923 = vrot.slane %v228, 2
      %v924 = vsel %vm876, %v922, %v923
      %v925 = vrot.slane %v229, 2
      %v926 = vsel %vm876, %v923, %v925
      %v927 = vrot.slane %v230, 2
      %v928 = vrot.slane %v231, 2
      %v929 = vsel %vm876, %v927, %v928
      %v930 = vrot.slane %v232, 2
      %v931 = vsel %vm876, %v928, %v930
      %v932 = vrot.slane %v233, 2
      %v933 = vrot.slane %v234, 2
      %v934 = vsel %vm876, %v932, %v933
      %v935 = vrot.slane %v235, 2
      %v936 = vsel %vm876, %v933, %v935
      %v937 = vrot.slane %v236, 2
      %v938 = vrot.slane %v237, 2
      %v939 = vsel %vm876, %v937, %v938
      %v940 = vrot.slane %v238, 2
      %v941 = vsel %vm876, %v938, %v940
      %v942 = vrot.slane %v239, 2
      %v943 = vrot.slane %v240, 2
      %v944 = vsel %vm876, %v942, %v943
      %v945 = vrot.slane %v241, 2
      %v946 = vsel %vm876, %v943, %v945
      %v947 = vrot.slane %v242, 2
      %v948 = vrot.slane %v243, 2
      %v949 = vsel %vm876, %v947, %v948
      %v950 = vrot.slane %v244, 2
      %v951 = vsel %vm876, %v948, %v950
      %v952 = vrot.slane %v245, 2
      %v953 = vrot.slane %v246, 2
      %v954 = vsel %vm876, %v952, %v953
      %v955 = vrot.slane %v247, 2
      %v956 = vsel %vm876, %v953, %v955
      %v989 = vpack.c.bf16 %v881, %v879
      %v990 = vpack.c.bf16 %v886, %v884
      %v991 = vpack.c.bf16 %v891, %v889
      %v992 = vpack.c.bf16 %v896, %v894
      %v993 = vpack.c.bf16 %v901, %v899
      %v994 = vpack.c.bf16 %v906, %v904
      %v995 = vpack.c.bf16 %v911, %v909
      %v996 = vpack.c.bf16 %v916, %v914
      %v997 = vpack.c.bf16 %v921, %v919
      %v998 = vpack.c.bf16 %v926, %v924
      %v999 = vpack.c.bf16 %v931, %v929
      %v1000 = vpack.c.bf16 %v936, %v934
      %v1001 = vpack.c.bf16 %v941, %v939
      %v1002 = vpack.c.bf16 %v946, %v944
      %v1003 = vpack.c.bf16 %v951, %v949
      %v1004 = vpack.c.bf16 %v956, %v954
      %s1005 = scalar_lea.vmem %s1, 4
      %v1006 = vld [vmem:[%s1005] sm:$0x3]
      %v1008 = vsel %vm450, %v989, 0
      %v1011 = vsel %vm450, %v990, 0
      %v1014 = vsel %vm450, %v991, 0
      %v1017 = vsel %vm450, %v992, 0
      %v1020 = vsel %vm450, %v993, 0
      %v1023 = vsel %vm450, %v994, 0
      %v1026 = vsel %vm450, %v995, 0
      %v1029 = vsel %vm450, %v996, 0
      %v1032 = vsel %vm450, %v997, 0
      %v1035 = vsel %vm450, %v998, 0
      %v1038 = vsel %vm450, %v999, 0
      %v1041 = vsel %vm450, %v1000, 0
      %v1044 = vsel %vm450, %v1001, 0
      %v1047 = vsel %vm450, %v1002, 0
      %v1050 = vsel %vm450, %v1003, 0
      %v1053 = vsel %vm450, %v1004, 0
      %v1056 = vsel %vm499, %v1006, 0
      %1058 = vmatprep.subr.bf16.mxu0 0
      %1059 = vmatpush1.bf16.msra.mxu0 %v1056
      %1060 = vmatprep.subr.bf16.mxu0 0
      %1061 = vmatpush1.bf16.msra.mxu0 0
      %1062 = vmatprep.subr.bf16.mxu0 0
      %1063 = vmatpush1.bf16.msra.mxu0 0
      %1064 = vmatprep.subr.bf16.mxu0 0
      %1065 = vmatpush1.bf16.msra.mxu0 0
      %1066 = vmatprep.subr.bf16.mxu0 0
      %1067 = vmatpush1.bf16.msra.mxu0 0
      %1068 = vmatprep.subr.bf16.mxu0 0
      %1069 = vmatpush1.bf16.msra.mxu0 0
      %1070 = vmatprep.subr.bf16.mxu0 0
      %1071 = vmatpush1.bf16.msra.mxu0 0
      %1072 = vmatprep.subr.bf16.mxu0 0
      %1073 = vmatpush1.bf16.msra.mxu0 0
      %1074 = vmatprep.subr.bf16.mxu0 0
      %1075 = vmatpush1.bf16.msra.mxu0 0
      %1076 = vmatprep.subr.bf16.mxu0 0
      %1077 = vmatpush1.bf16.msra.mxu0 0
      %1078 = vmatprep.subr.bf16.mxu0 0
      %1079 = vmatpush1.bf16.msra.mxu0 0
      %1080 = vmatprep.subr.bf16.mxu0 0
      %1081 = vmatpush1.bf16.msra.mxu0 0
      %1082 = vmatprep.subr.bf16.mxu0 0
      %1083 = vmatpush1.bf16.msra.mxu0 0
      %1084 = vmatprep.subr.bf16.mxu0 0
      %1085 = vmatpush1.bf16.msra.mxu0 0
      %1086 = vmatprep.subr.bf16.mxu0 0
      %1087 = vmatpush1.bf16.msra.mxu0 0
      %1088 = vmatprep.subr.bf16.mxu0 0
      %1089 = vmatpush1.bf16.msra.mxu0 0
      %1090 = vmatprep.mubr.bf16.mxu0 0
      %1091 = vmatmul.mubr.bf16.gmra.mrb[0].mxu0 %v1008
      %v1092 = vpop.f32.mrb[0].mxu0
      %v1093 = vadd.f32 0.0, %v1092
      %v1094 = vpop.f32.mrb[0].mxu0
      %v1095 = vpop.f32.mrb[0].mxu0
      %v1096 = vadd.f32 0.0, %v1095
      %v1097 = vpop.f32.mrb[0].mxu0
      %1098 = vmatprep.mubr.bf16.mxu0 0
      %1099 = vmatmul.mubr.bf16.gmra.mrb[0].mxu0 %v1011
      %v1100 = vpop.f32.mrb[0].mxu0
      %v1101 = vadd.f32 0.0, %v1100
      %v1102 = vpop.f32.mrb[0].mxu0
      %v1103 = vpop.f32.mrb[0].mxu0
      %v1104 = vadd.f32 0.0, %v1103
      %v1105 = vpop.f32.mrb[0].mxu0
      %1106 = vmatprep.mubr.bf16.mxu0 0
      %1107 = vmatmul.mubr.bf16.gmra.mrb[0].mxu0 %v1014
      %v1108 = vpop.f32.mrb[0].mxu0
      %v1109 = vadd.f32 0.0, %v1108
      %v1110 = vpop.f32.mrb[0].mxu0
      %v1111 = vpop.f32.mrb[0].mxu0
      %v1112 = vadd.f32 0.0, %v1111
      %v1113 = vpop.f32.mrb[0].mxu0
      %1114 = vmatprep.mubr.bf16.mxu0 0
      %1115 = vmatmul.mubr.bf16.gmra.mrb[0].mxu0 %v1017
      %v1116 = vpop.f32.mrb[0].mxu0
      %v1117 = vadd.f32 0.0, %v1116
      %v1118 = vpop.f32.mrb[0].mxu0
      %v1119 = vpop.f32.mrb[0].mxu0
      %v1120 = vadd.f32 0.0, %v1119
      %v1121 = vpop.f32.mrb[0].mxu0
      %1122 = vmatprep.mubr.bf16.mxu0 0
      %1123 = vmatmul.mubr.bf16.gmra.mrb[0].mxu0 %v1020
      %v1124 = vpop.f32.mrb[0].mxu0
      %v1125 = vadd.f32 0.0, %v1124
      %v1126 = vpop.f32.mrb[0].mxu0
      %v1127 = vpop.f32.mrb[0].mxu0
      %v1128 = vadd.f32 0.0, %v1127
      %v1129 = vpop.f32.mrb[0].mxu0
      %1130 = vmatprep.mubr.bf16.mxu0 0
      %1131 = vmatmul.mubr.bf16.gmra.mrb[0].mxu0 %v1023
      %v1132 = vpop.f32.mrb[0].mxu0
      %v1133 = vadd.f32 0.0, %v1132
      %v1134 = vpop.f32.mrb[0].mxu0
      %v1135 = vpop.f32.mrb[0].mxu0
      %v1136 = vadd.f32 0.0, %v1135
      %v1137 = vpop.f32.mrb[0].mxu0
      %1138 = vmatprep.mubr.bf16.mxu0 0
      %1139 = vmatmul.mubr.bf16.gmra.mrb[0].mxu0 %v1026
      %v1140 = vpop.f32.mrb[0].mxu0
      %v1141 = vadd.f32 0.0, %v1140
      %v1142 = vpop.f32.mrb[0].mxu0
      %v1143 = vpop.f32.mrb[0].mxu0
      %v1144 = vadd.f32 0.0, %v1143
      %v1145 = vpop.f32.mrb[0].mxu0
      %1146 = vmatprep.mubr.bf16.mxu0 0
      %1147 = vmatmul.mubr.bf16.gmra.mrb[0].mxu0 %v1029
      %v1148 = vpop.f32.mrb[0].mxu0
      %v1149 = vadd.f32 0.0, %v1148
      %v1150 = vpop.f32.mrb[0].mxu0
      %v1151 = vpop.f32.mrb[0].mxu0
      %v1152 = vadd.f32 0.0, %v1151
      %v1153 = vpop.f32.mrb[0].mxu0
      %1154 = vmatprep.mubr.bf16.mxu0 0
      %1155 = vmatmul.mubr.bf16.gmra.mrb[0].mxu0 %v1032
      %v1156 = vpop.f32.mrb[0].mxu0
      %v1157 = vadd.f32 0.0, %v1156
      %v1158 = vpop.f32.mrb[0].mxu0
      %v1159 = vpop.f32.mrb[0].mxu0
      %v1160 = vadd.f32 0.0, %v1159
      %v1161 = vpop.f32.mrb[0].mxu0
      %1162 = vmatprep.mubr.bf16.mxu0 0
      %1163 = vmatmul.mubr.bf16.gmra.mrb[0].mxu0 %v1035
      %v1164 = vpop.f32.mrb[0].mxu0
      %v1165 = vadd.f32 0.0, %v1164
      %v1166 = vpop.f32.mrb[0].mxu0
      %v1167 = vpop.f32.mrb[0].mxu0
      %v1168 = vadd.f32 0.0, %v1167
      %v1169 = vpop.f32.mrb[0].mxu0
      %1170 = vmatprep.mubr.bf16.mxu0 0
      %1171 = vmatmul.mubr.bf16.gmra.mrb[0].mxu0 %v1038
      %v1172 = vpop.f32.mrb[0].mxu0
      %v1173 = vadd.f32 0.0, %v1172
      %v1174 = vpop.f32.mrb[0].mxu0
      %v1175 = vpop.f32.mrb[0].mxu0
      %v1176 = vadd.f32 0.0, %v1175
      %v1177 = vpop.f32.mrb[0].mxu0
      %1178 = vmatprep.mubr.bf16.mxu0 0
      %1179 = vmatmul.mubr.bf16.gmra.mrb[0].mxu0 %v1041
      %v1180 = vpop.f32.mrb[0].mxu0
      %v1181 = vadd.f32 0.0, %v1180
      %v1182 = vpop.f32.mrb[0].mxu0
      %v1183 = vpop.f32.mrb[0].mxu0
      %v1184 = vadd.f32 0.0, %v1183
      %v1185 = vpop.f32.mrb[0].mxu0
      %1186 = vmatprep.mubr.bf16.mxu0 0
      %1187 = vmatmul.mubr.bf16.gmra.mrb[0].mxu0 %v1044
      %v1188 = vpop.f32.mrb[0].mxu0
      %v1189 = vadd.f32 0.0, %v1188
      %v1190 = vpop.f32.mrb[0].mxu0
      %v1191 = vpop.f32.mrb[0].mxu0
      %v1192 = vadd.f32 0.0, %v1191
      %v1193 = vpop.f32.mrb[0].mxu0
      %1194 = vmatprep.mubr.bf16.mxu0 0
      %1195 = vmatmul.mubr.bf16.gmra.mrb[0].mxu0 %v1047
      %v1196 = vpop.f32.mrb[0].mxu0
      %v1197 = vadd.f32 0.0, %v1196
      %v1198 = vpop.f32.mrb[0].mxu0
      %v1199 = vpop.f32.mrb[0].mxu0
      %v1200 = vadd.f32 0.0, %v1199
      %v1201 = vpop.f32.mrb[0].mxu0
      %1202 = vmatprep.mubr.bf16.mxu0 0
      %1203 = vmatmul.mubr.bf16.gmra.mrb[0].mxu0 %v1050
      %v1204 = vpop.f32.mrb[0].mxu0
      %v1205 = vadd.f32 0.0, %v1204
      %v1206 = vpop.f32.mrb[0].mxu0
      %v1207 = vpop.f32.mrb[0].mxu0
      %v1208 = vadd.f32 0.0, %v1207
      %v1209 = vpop.f32.mrb[0].mxu0
      %1210 = vmatprep.mubr.bf16.mxu0 0
      %1211 = vmatmul.mubr.bf16.gmra.mrb[0].mxu0 %v1053
      %v1212 = vpop.f32.mrb[0].mxu0
      %v1213 = vadd.f32 0.0, %v1212
      %v1214 = vpop.f32.mrb[0].mxu0
      %v1215 = vpop.f32.mrb[0].mxu0
      %v1216 = vadd.f32 0.0, %v1215
      %v1217 = vpop.f32.mrb[0].mxu0
      %1218 = vdwg.mxu0
      %v1219 = vadd.f32 %v750, %v1093
      %v1220 = vadd.f32 %v753, %v1096
      %v1221 = vadd.f32 %v758, %v1101
      %v1222 = vadd.f32 %v761, %v1104
      %v1223 = vadd.f32 %v766, %v1109
      %v1224 = vadd.f32 %v769, %v1112
      %v1225 = vadd.f32 %v774, %v1117
      %v1226 = vadd.f32 %v777, %v1120
      %v1227 = vadd.f32 %v782, %v1125
      %v1228 = vadd.f32 %v785, %v1128
      %v1229 = vadd.f32 %v790, %v1133
      %v1230 = vadd.f32 %v793, %v1136
      %v1231 = vadd.f32 %v798, %v1141
      %v1232 = vadd.f32 %v801, %v1144
      %v1233 = vadd.f32 %v806, %v1149
      %v1234 = vadd.f32 %v809, %v1152
      %v1235 = vadd.f32 %v814, %v1157
      %v1236 = vadd.f32 %v817, %v1160
      %v1237 = vadd.f32 %v822, %v1165
      %v1238 = vadd.f32 %v825, %v1168
      %v1239 = vadd.f32 %v830, %v1173
      %v1240 = vadd.f32 %v833, %v1176
      %v1241 = vadd.f32 %v838, %v1181
      %v1242 = vadd.f32 %v841, %v1184
      %v1243 = vadd.f32 %v846, %v1189
      %v1244 = vadd.f32 %v849, %v1192
      %v1245 = vadd.f32 %v854, %v1197
      %v1246 = vadd.f32 %v857, %v1200
      %v1247 = vadd.f32 %v862, %v1205
      %v1248 = vadd.f32 %v865, %v1208
      %v1249 = vadd.f32 %v870, %v1213
      %v1250 = vadd.f32 %v873, %v1216
      %v1251 = vpack.c.bf16 %v249, %v248
      %s1252 = scalar_lea.vmem %s1, 6
      %v1253 = vld [vmem:[%s1252] sm:$0x3]
      %v1255 = vsel %vm450, %v1251, 0
      %v1258 = vsel %vm499, %v1253, 0
      %1260 = vmatprep.subr.bf16.mxu0 0
      %1261 = vmatpush1.bf16.msra.mxu0 %v1258
      %1262 = vmatprep.subr.bf16.mxu0 0
      %1263 = vmatpush1.bf16.msra.mxu0 0
      %1264 = vmatprep.subr.bf16.mxu0 0
      %1265 = vmatpush1.bf16.msra.mxu0 0
      %1266 = vmatprep.subr.bf16.mxu0 0
      %1267 = vmatpush1.bf16.msra.mxu0 0
      %1268 = vmatprep.subr.bf16.mxu0 0
      %1269 = vmatpush1.bf16.msra.mxu0 0
      %1270 = vmatprep.subr.bf16.mxu0 0
      %1271 = vmatpush1.bf16.msra.mxu0 0
      %1272 = vmatprep.subr.bf16.mxu0 0
      %1273 = vmatpush1.bf16.msra.mxu0 0
      %1274 = vmatprep.subr.bf16.mxu0 0
      %1275 = vmatpush1.bf16.msra.mxu0 0
      %1276 = vmatprep.subr.bf16.mxu0 0
      %1277 = vmatpush1.bf16.msra.mxu0 0
      %1278 = vmatprep.subr.bf16.mxu0 0
      %1279 = vmatpush1.bf16.msra.mxu0 0
      %1280 = vmatprep.subr.bf16.mxu0 0
      %1281 = vmatpush1.bf16.msra.mxu0 0
      %1282 = vmatprep.subr.bf16.mxu0 0
      %1283 = vmatpush1.bf16.msra.mxu0 0
      %1284 = vmatprep.subr.bf16.mxu0 0
      %1285 = vmatpush1.bf16.msra.mxu0 0
      %1286 = vmatprep.subr.bf16.mxu0 0
      %1287 = vmatpush1.bf16.msra.mxu0 0
      %1288 = vmatprep.subr.bf16.mxu0 0
      %1289 = vmatpush1.bf16.msra.mxu0 0
      %1290 = vmatprep.subr.bf16.mxu0 0
      %1291 = vmatpush1.bf16.msra.mxu0 0
      %1292 = vmatprep.mubr.bf16.mxu0 0
      %1293 = vmatmul.mubr.bf16.gmra.mrb[0].mxu0 %v668
      %v1294 = vpop.f32.mrb[0].mxu0
      %v1295 = vadd.f32 0.0, %v1294
      %v1296 = vpop.f32.mrb[0].mxu0
      %v1297 = vpop.f32.mrb[0].mxu0
      %v1298 = vadd.f32 0.0, %v1297
      %v1299 = vpop.f32.mrb[0].mxu0
      %1300 = vmatprep.mubr.bf16.mxu0 0
      %1301 = vmatmul.mubr.bf16.gmra.mrb[0].mxu0 %v671
      %v1302 = vpop.f32.mrb[0].mxu0
      %v1303 = vadd.f32 0.0, %v1302
      %v1304 = vpop.f32.mrb[0].mxu0
      %v1305 = vpop.f32.mrb[0].mxu0
      %v1306 = vadd.f32 0.0, %v1305
      %v1307 = vpop.f32.mrb[0].mxu0
      %1308 = vmatprep.mubr.bf16.mxu0 0
      %1309 = vmatmul.mubr.bf16.gmra.mrb[0].mxu0 %v674
      %v1310 = vpop.f32.mrb[0].mxu0
      %v1311 = vadd.f32 0.0, %v1310
      %v1312 = vpop.f32.mrb[0].mxu0
      %v1313 = vpop.f32.mrb[0].mxu0
      %v1314 = vadd.f32 0.0, %v1313
      %v1315 = vpop.f32.mrb[0].mxu0
      %1316 = vmatprep.mubr.bf16.mxu0 0
      %1317 = vmatmul.mubr.bf16.gmra.mrb[0].mxu0 %v677
      %v1318 = vpop.f32.mrb[0].mxu0
      %v1319 = vadd.f32 0.0, %v1318
      %v1320 = vpop.f32.mrb[0].mxu0
      %v1321 = vpop.f32.mrb[0].mxu0
      %v1322 = vadd.f32 0.0, %v1321
      %v1323 = vpop.f32.mrb[0].mxu0
      %1324 = vmatprep.mubr.bf16.mxu0 0
      %1325 = vmatmul.mubr.bf16.gmra.mrb[0].mxu0 %v680
      %v1326 = vpop.f32.mrb[0].mxu0
      %v1327 = vadd.f32 0.0, %v1326
      %v1328 = vpop.f32.mrb[0].mxu0
      %v1329 = vpop.f32.mrb[0].mxu0
      %v1330 = vadd.f32 0.0, %v1329
      %v1331 = vpop.f32.mrb[0].mxu0
      %1332 = vmatprep.mubr.bf16.mxu0 0
      %1333 = vmatmul.mubr.bf16.gmra.mrb[0].mxu0 %v683
      %v1334 = vpop.f32.mrb[0].mxu0
      %v1335 = vadd.f32 0.0, %v1334
      %v1336 = vpop.f32.mrb[0].mxu0
      %v1337 = vpop.f32.mrb[0].mxu0
      %v1338 = vadd.f32 0.0, %v1337
      %v1339 = vpop.f32.mrb[0].mxu0
      %1340 = vmatprep.mubr.bf16.mxu0 0
      %1341 = vmatmul.mubr.bf16.gmra.mrb[0].mxu0 %v686
      %v1342 = vpop.f32.mrb[0].mxu0
      %v1343 = vadd.f32 0.0, %v1342
      %v1344 = vpop.f32.mrb[0].mxu0
      %v1345 = vpop.f32.mrb[0].mxu0
      %v1346 = vadd.f32 0.0, %v1345
      %v1347 = vpop.f32.mrb[0].mxu0
      %1348 = vmatprep.mubr.bf16.mxu0 0
      %1349 = vmatmul.mubr.bf16.gmra.mrb[0].mxu0 %v689
      %v1350 = vpop.f32.mrb[0].mxu0
      %v1351 = vadd.f32 0.0, %v1350
      %v1352 = vpop.f32.mrb[0].mxu0
      %v1353 = vpop.f32.mrb[0].mxu0
      %v1354 = vadd.f32 0.0, %v1353
      %v1355 = vpop.f32.mrb[0].mxu0
      %1356 = vmatprep.mubr.bf16.mxu0 0
      %1357 = vmatmul.mubr.bf16.gmra.mrb[0].mxu0 %v692
      %v1358 = vpop.f32.mrb[0].mxu0
      %v1359 = vadd.f32 0.0, %v1358
      %v1360 = vpop.f32.mrb[0].mxu0
      %v1361 = vpop.f32.mrb[0].mxu0
      %v1362 = vadd.f32 0.0, %v1361
      %v1363 = vpop.f32.mrb[0].mxu0
      %1364 = vmatprep.mubr.bf16.mxu0 0
      %1365 = vmatmul.mubr.bf16.gmra.mrb[0].mxu0 %v695
      %v1366 = vpop.f32.mrb[0].mxu0
      %v1367 = vadd.f32 0.0, %v1366
      %v1368 = vpop.f32.mrb[0].mxu0
      %v1369 = vpop.f32.mrb[0].mxu0
      %v1370 = vadd.f32 0.0, %v1369
      %v1371 = vpop.f32.mrb[0].mxu0
      %1372 = vmatprep.mubr.bf16.mxu0 0
      %1373 = vmatmul.mubr.bf16.gmra.mrb[0].mxu0 %v698
      %v1374 = vpop.f32.mrb[0].mxu0
      %v1375 = vadd.f32 0.0, %v1374
      %v1376 = vpop.f32.mrb[0].mxu0
      %v1377 = vpop.f32.mrb[0].mxu0
      %v1378 = vadd.f32 0.0, %v1377
      %v1379 = vpop.f32.mrb[0].mxu0
      %1380 = vmatprep.mubr.bf16.mxu0 0
      %1381 = vmatmul.mubr.bf16.gmra.mrb[0].mxu0 %v701
      %v1382 = vpop.f32.mrb[0].mxu0
      %v1383 = vadd.f32 0.0, %v1382
      %v1384 = vpop.f32.mrb[0].mxu0
      %v1385 = vpop.f32.mrb[0].mxu0
      %v1386 = vadd.f32 0.0, %v1385
      %v1387 = vpop.f32.mrb[0].mxu0
      %1388 = vmatprep.mubr.bf16.mxu0 0
      %1389 = vmatmul.mubr.bf16.gmra.mrb[0].mxu0 %v704
      %v1390 = vpop.f32.mrb[0].mxu0
      %v1391 = vadd.f32 0.0, %v1390
      %v1392 = vpop.f32.mrb[0].mxu0
      %v1393 = vpop.f32.mrb[0].mxu0
      %v1394 = vadd.f32 0.0, %v1393
      %v1395 = vpop.f32.mrb[0].mxu0
      %1396 = vmatprep.mubr.bf16.mxu0 0
      %1397 = vmatmul.mubr.bf16.gmra.mrb[0].mxu0 %v707
      %v1398 = vpop.f32.mrb[0].mxu0
      %v1399 = vadd.f32 0.0, %v1398
      %v1400 = vpop.f32.mrb[0].mxu0
      %v1401 = vpop.f32.mrb[0].mxu0
      %v1402 = vadd.f32 0.0, %v1401
      %v1403 = vpop.f32.mrb[0].mxu0
      %1404 = vmatprep.mubr.bf16.mxu0 0
      %1405 = vmatmul.mubr.bf16.gmra.mrb[0].mxu0 %v710
      %v1406 = vpop.f32.mrb[0].mxu0
      %v1407 = vadd.f32 0.0, %v1406
      %v1408 = vpop.f32.mrb[0].mxu0
      %v1409 = vpop.f32.mrb[0].mxu0
      %v1410 = vadd.f32 0.0, %v1409
      %v1411 = vpop.f32.mrb[0].mxu0
      %1412 = vmatprep.mubr.bf16.mxu0 0
      %1413 = vmatmul.mubr.bf16.gmra.mrb[0].mxu0 %v1255
      %v1414 = vpop.f32.mrb[0].mxu0
      %v1415 = vadd.f32 0.0, %v1414
      %v1416 = vpop.f32.mrb[0].mxu0
      %v1417 = vpop.f32.mrb[0].mxu0
      %v1418 = vadd.f32 0.0, %v1417
      %v1419 = vpop.f32.mrb[0].mxu0
      %1420 = vdwg.mxu0
      %v1421 = vadd.f32 %v1219, %v1295
      %v1422 = vadd.f32 %v1220, %v1298
      %v1423 = vadd.f32 %v1221, %v1303
      %v1424 = vadd.f32 %v1222, %v1306
      %v1425 = vadd.f32 %v1223, %v1311
      %v1426 = vadd.f32 %v1224, %v1314
      %v1427 = vadd.f32 %v1225, %v1319
      %v1428 = vadd.f32 %v1226, %v1322
      %v1429 = vadd.f32 %v1227, %v1327
      %v1430 = vadd.f32 %v1228, %v1330
      %v1431 = vadd.f32 %v1229, %v1335
      %v1432 = vadd.f32 %v1230, %v1338
      %v1433 = vadd.f32 %v1231, %v1343
      %v1434 = vadd.f32 %v1232, %v1346
      %v1435 = vadd.f32 %v1233, %v1351
      %v1436 = vadd.f32 %v1234, %v1354
      %v1437 = vadd.f32 %v1235, %v1359
      %v1438 = vadd.f32 %v1236, %v1362
      %v1439 = vadd.f32 %v1237, %v1367
      %v1440 = vadd.f32 %v1238, %v1370
      %v1441 = vadd.f32 %v1239, %v1375
      %v1442 = vadd.f32 %v1240, %v1378
      %v1443 = vadd.f32 %v1241, %v1383
      %v1444 = vadd.f32 %v1242, %v1386
      %v1445 = vadd.f32 %v1243, %v1391
      %v1446 = vadd.f32 %v1244, %v1394
      %v1447 = vadd.f32 %v1245, %v1399
      %v1448 = vadd.f32 %v1246, %v1402
      %v1449 = vadd.f32 %v1247, %v1407
      %v1450 = vadd.f32 %v1248, %v1410
      %v1451 = vadd.f32 %v1249, %v1415
      %v1452 = vadd.f32 %v1250, %v1418
      %v1456 = vrot.slane %v248, 1
      %v1457 = vrot.slane %v249, 1
      %v1458 = vsel %vm319, %v1456, %v1457
      %v1459 = vrot.slane %v250, 1
      %v1460 = vsel %vm319, %v1457, %v1459
      %v1463 = vpack.c.bf16 %v1460, %v1458
      %s1464 = scalar_lea.vmem %s1, 8
      %v1465 = vld [vmem:[%s1464] sm:$0x3]
      %v1467 = vsel %vm450, %v1463, 0
      %v1470 = vsel %vm499, %v1465, 0
      %1472 = vmatprep.subr.bf16.mxu0 0
      %1473 = vmatpush1.bf16.msra.mxu0 %v1470
      %1474 = vmatprep.subr.bf16.mxu0 0
      %1475 = vmatpush1.bf16.msra.mxu0 0
      %1476 = vmatprep.subr.bf16.mxu0 0
      %1477 = vmatpush1.bf16.msra.mxu0 0
      %1478 = vmatprep.subr.bf16.mxu0 0
      %1479 = vmatpush1.bf16.msra.mxu0 0
      %1480 = vmatprep.subr.bf16.mxu0 0
      %1481 = vmatpush1.bf16.msra.mxu0 0
      %1482 = vmatprep.subr.bf16.mxu0 0
      %1483 = vmatpush1.bf16.msra.mxu0 0
      %1484 = vmatprep.subr.bf16.mxu0 0
      %1485 = vmatpush1.bf16.msra.mxu0 0
      %1486 = vmatprep.subr.bf16.mxu0 0
      %1487 = vmatpush1.bf16.msra.mxu0 0
      %1488 = vmatprep.subr.bf16.mxu0 0
      %1489 = vmatpush1.bf16.msra.mxu0 0
      %1490 = vmatprep.subr.bf16.mxu0 0
      %1491 = vmatpush1.bf16.msra.mxu0 0
      %1492 = vmatprep.subr.bf16.mxu0 0
      %1493 = vmatpush1.bf16.msra.mxu0 0
      %1494 = vmatprep.subr.bf16.mxu0 0
      %1495 = vmatpush1.bf16.msra.mxu0 0
      %1496 = vmatprep.subr.bf16.mxu0 0
      %1497 = vmatpush1.bf16.msra.mxu0 0
      %1498 = vmatprep.subr.bf16.mxu0 0
      %1499 = vmatpush1.bf16.msra.mxu0 0
      %1500 = vmatprep.subr.bf16.mxu0 0
      %1501 = vmatpush1.bf16.msra.mxu0 0
      %1502 = vmatprep.subr.bf16.mxu0 0
      %1503 = vmatpush1.bf16.msra.mxu0 0
      %1504 = vmatprep.mubr.bf16.mxu0 0
      %1505 = vmatmul.mubr.bf16.gmra.mrb[0].mxu0 %v455
      %v1506 = vpop.f32.mrb[0].mxu0
      %v1507 = vadd.f32 0.0, %v1506
      %v1508 = vpop.f32.mrb[0].mxu0
      %v1509 = vpop.f32.mrb[0].mxu0
      %v1510 = vadd.f32 0.0, %v1509
      %v1511 = vpop.f32.mrb[0].mxu0
      %1512 = vmatprep.mubr.bf16.mxu0 0
      %1513 = vmatmul.mubr.bf16.gmra.mrb[0].mxu0 %v458
      %v1514 = vpop.f32.mrb[0].mxu0
      %v1515 = vadd.f32 0.0, %v1514
      %v1516 = vpop.f32.mrb[0].mxu0
      %v1517 = vpop.f32.mrb[0].mxu0
      %v1518 = vadd.f32 0.0, %v1517
      %v1519 = vpop.f32.mrb[0].mxu0
      %1520 = vmatprep.mubr.bf16.mxu0 0
      %1521 = vmatmul.mubr.bf16.gmra.mrb[0].mxu0 %v461
      %v1522 = vpop.f32.mrb[0].mxu0
      %v1523 = vadd.f32 0.0, %v1522
      %v1524 = vpop.f32.mrb[0].mxu0
      %v1525 = vpop.f32.mrb[0].mxu0
      %v1526 = vadd.f32 0.0, %v1525
      %v1527 = vpop.f32.mrb[0].mxu0
      %1528 = vmatprep.mubr.bf16.mxu0 0
      %1529 = vmatmul.mubr.bf16.gmra.mrb[0].mxu0 %v464
      %v1530 = vpop.f32.mrb[0].mxu0
      %v1531 = vadd.f32 0.0, %v1530
      %v1532 = vpop.f32.mrb[0].mxu0
      %v1533 = vpop.f32.mrb[0].mxu0
      %v1534 = vadd.f32 0.0, %v1533
      %v1535 = vpop.f32.mrb[0].mxu0
      %1536 = vmatprep.mubr.bf16.mxu0 0
      %1537 = vmatmul.mubr.bf16.gmra.mrb[0].mxu0 %v467
      %v1538 = vpop.f32.mrb[0].mxu0
      %v1539 = vadd.f32 0.0, %v1538
      %v1540 = vpop.f32.mrb[0].mxu0
      %v1541 = vpop.f32.mrb[0].mxu0
      %v1542 = vadd.f32 0.0, %v1541
      %v1543 = vpop.f32.mrb[0].mxu0
      %1544 = vmatprep.mubr.bf16.mxu0 0
      %1545 = vmatmul.mubr.bf16.gmra.mrb[0].mxu0 %v470
      %v1546 = vpop.f32.mrb[0].mxu0
      %v1547 = vadd.f32 0.0, %v1546
      %v1548 = vpop.f32.mrb[0].mxu0
      %v1549 = vpop.f32.mrb[0].mxu0
      %v1550 = vadd.f32 0.0, %v1549
      %v1551 = vpop.f32.mrb[0].mxu0
      %1552 = vmatprep.mubr.bf16.mxu0 0
      %1553 = vmatmul.mubr.bf16.gmra.mrb[0].mxu0 %v473
      %v1554 = vpop.f32.mrb[0].mxu0
      %v1555 = vadd.f32 0.0, %v1554
      %v1556 = vpop.f32.mrb[0].mxu0
      %v1557 = vpop.f32.mrb[0].mxu0
      %v1558 = vadd.f32 0.0, %v1557
      %v1559 = vpop.f32.mrb[0].mxu0
      %1560 = vmatprep.mubr.bf16.mxu0 0
      %1561 = vmatmul.mubr.bf16.gmra.mrb[0].mxu0 %v476
      %v1562 = vpop.f32.mrb[0].mxu0
      %v1563 = vadd.f32 0.0, %v1562
      %v1564 = vpop.f32.mrb[0].mxu0
      %v1565 = vpop.f32.mrb[0].mxu0
      %v1566 = vadd.f32 0.0, %v1565
      %v1567 = vpop.f32.mrb[0].mxu0
      %1568 = vmatprep.mubr.bf16.mxu0 0
      %1569 = vmatmul.mubr.bf16.gmra.mrb[0].mxu0 %v479
      %v1570 = vpop.f32.mrb[0].mxu0
      %v1571 = vadd.f32 0.0, %v1570
      %v1572 = vpop.f32.mrb[0].mxu0
      %v1573 = vpop.f32.mrb[0].mxu0
      %v1574 = vadd.f32 0.0, %v1573
      %v1575 = vpop.f32.mrb[0].mxu0
      %1576 = vmatprep.mubr.bf16.mxu0 0
      %1577 = vmatmul.mubr.bf16.gmra.mrb[0].mxu0 %v482
      %v1578 = vpop.f32.mrb[0].mxu0
      %v1579 = vadd.f32 0.0, %v1578
      %v1580 = vpop.f32.mrb[0].mxu0
      %v1581 = vpop.f32.mrb[0].mxu0
      %v1582 = vadd.f32 0.0, %v1581
      %v1583 = vpop.f32.mrb[0].mxu0
      %1584 = vmatprep.mubr.bf16.mxu0 0
      %1585 = vmatmul.mubr.bf16.gmra.mrb[0].mxu0 %v485
      %v1586 = vpop.f32.mrb[0].mxu0
      %v1587 = vadd.f32 0.0, %v1586
      %v1588 = vpop.f32.mrb[0].mxu0
      %v1589 = vpop.f32.mrb[0].mxu0
      %v1590 = vadd.f32 0.0, %v1589
      %v1591 = vpop.f32.mrb[0].mxu0
      %1592 = vmatprep.mubr.bf16.mxu0 0
      %1593 = vmatmul.mubr.bf16.gmra.mrb[0].mxu0 %v488
      %v1594 = vpop.f32.mrb[0].mxu0
      %v1595 = vadd.f32 0.0, %v1594
      %v1596 = vpop.f32.mrb[0].mxu0
      %v1597 = vpop.f32.mrb[0].mxu0
      %v1598 = vadd.f32 0.0, %v1597
      %v1599 = vpop.f32.mrb[0].mxu0
      %1600 = vmatprep.mubr.bf16.mxu0 0
      %1601 = vmatmul.mubr.bf16.gmra.mrb[0].mxu0 %v491
      %v1602 = vpop.f32.mrb[0].mxu0
      %v1603 = vadd.f32 0.0, %v1602
      %v1604 = vpop.f32.mrb[0].mxu0
      %v1605 = vpop.f32.mrb[0].mxu0
      %v1606 = vadd.f32 0.0, %v1605
      %v1607 = vpop.f32.mrb[0].mxu0
      %1608 = vmatprep.mubr.bf16.mxu0 0
      %1609 = vmatmul.mubr.bf16.gmra.mrb[0].mxu0 %v494
      %v1610 = vpop.f32.mrb[0].mxu0
      %v1611 = vadd.f32 0.0, %v1610
      %v1612 = vpop.f32.mrb[0].mxu0
      %v1613 = vpop.f32.mrb[0].mxu0
      %v1614 = vadd.f32 0.0, %v1613
      %v1615 = vpop.f32.mrb[0].mxu0
      %1616 = vmatprep.mubr.bf16.mxu0 0
      %1617 = vmatmul.mubr.bf16.gmra.mrb[0].mxu0 %v497
      %v1618 = vpop.f32.mrb[0].mxu0
      %v1619 = vadd.f32 0.0, %v1618
      %v1620 = vpop.f32.mrb[0].mxu0
      %v1621 = vpop.f32.mrb[0].mxu0
      %v1622 = vadd.f32 0.0, %v1621
      %v1623 = vpop.f32.mrb[0].mxu0
      %1624 = vmatprep.mubr.bf16.mxu0 0
      %1625 = vmatmul.mubr.bf16.gmra.mrb[0].mxu0 %v1467
      %v1626 = vpop.f32.mrb[0].mxu0
      %v1627 = vadd.f32 0.0, %v1626
      %v1628 = vpop.f32.mrb[0].mxu0
      %v1629 = vpop.f32.mrb[0].mxu0
      %v1630 = vadd.f32 0.0, %v1629
      %v1631 = vpop.f32.mrb[0].mxu0
      %1632 = vdwg.mxu0
      %v1633 = vadd.f32 %v1421, %v1507
      %v1634 = vadd.f32 %v1422, %v1510
      %v1635 = vadd.f32 %v1423, %v1515
      %v1636 = vadd.f32 %v1424, %v1518
      %v1637 = vadd.f32 %v1425, %v1523
      %v1638 = vadd.f32 %v1426, %v1526
      %v1639 = vadd.f32 %v1427, %v1531
      %v1640 = vadd.f32 %v1428, %v1534
      %v1641 = vadd.f32 %v1429, %v1539
      %v1642 = vadd.f32 %v1430, %v1542
      %v1643 = vadd.f32 %v1431, %v1547
      %v1644 = vadd.f32 %v1432, %v1550
      %v1645 = vadd.f32 %v1433, %v1555
      %v1646 = vadd.f32 %v1434, %v1558
      %v1647 = vadd.f32 %v1435, %v1563
      %v1648 = vadd.f32 %v1436, %v1566
      %v1649 = vadd.f32 %v1437, %v1571
      %v1650 = vadd.f32 %v1438, %v1574
      %v1651 = vadd.f32 %v1439, %v1579
      %v1652 = vadd.f32 %v1440, %v1582
      %v1653 = vadd.f32 %v1441, %v1587
      %v1654 = vadd.f32 %v1442, %v1590
      %v1655 = vadd.f32 %v1443, %v1595
      %v1656 = vadd.f32 %v1444, %v1598
      %v1657 = vadd.f32 %v1445, %v1603
      %v1658 = vadd.f32 %v1446, %v1606
      %v1659 = vadd.f32 %v1447, %v1611
      %v1660 = vadd.f32 %v1448, %v1614
      %v1661 = vadd.f32 %v1449, %v1619
      %v1662 = vadd.f32 %v1450, %v1622
      %v1663 = vadd.f32 %v1451, %v1627
      %v1664 = vadd.f32 %v1452, %v1630
      %v1665 = vrot.slane %v248, 2
      %v1666 = vrot.slane %v249, 2
      %v1667 = vsel %vm876, %v1665, %v1666
      %v1668 = vrot.slane %v250, 2
      %v1669 = vsel %vm876, %v1666, %v1668
      %v1672 = vpack.c.bf16 %v1669, %v1667
      %s1673 = scalar_lea.vmem %s1, 10
      %v1674 = vld [vmem:[%s1673] sm:$0x3]
      %v1676 = vsel %vm450, %v1672, 0
      %v1679 = vsel %vm499, %v1674, 0
      %1681 = vmatprep.subr.bf16.mxu0 0
      %1682 = vmatpush1.bf16.msra.mxu0 %v1679
      %1683 = vmatprep.subr.bf16.mxu0 0
      %1684 = vmatpush1.bf16.msra.mxu0 0
      %1685 = vmatprep.subr.bf16.mxu0 0
      %1686 = vmatpush1.bf16.msra.mxu0 0
      %1687 = vmatprep.subr.bf16.mxu0 0
      %1688 = vmatpush1.bf16.msra.mxu0 0
      %1689 = vmatprep.subr.bf16.mxu0 0
      %1690 = vmatpush1.bf16.msra.mxu0 0
      %1691 = vmatprep.subr.bf16.mxu0 0
      %1692 = vmatpush1.bf16.msra.mxu0 0
      %1693 = vmatprep.subr.bf16.mxu0 0
      %1694 = vmatpush1.bf16.msra.mxu0 0
      %1695 = vmatprep.subr.bf16.mxu0 0
      %1696 = vmatpush1.bf16.msra.mxu0 0
      %1697 = vmatprep.subr.bf16.mxu0 0
      %1698 = vmatpush1.bf16.msra.mxu0 0
      %1699 = vmatprep.subr.bf16.mxu0 0
      %1700 = vmatpush1.bf16.msra.mxu0 0
      %1701 = vmatprep.subr.bf16.mxu0 0
      %1702 = vmatpush1.bf16.msra.mxu0 0
      %1703 = vmatprep.subr.bf16.mxu0 0
      %1704 = vmatpush1.bf16.msra.mxu0 0
      %1705 = vmatprep.subr.bf16.mxu0 0
      %1706 = vmatpush1.bf16.msra.mxu0 0
      %1707 = vmatprep.subr.bf16.mxu0 0
      %1708 = vmatpush1.bf16.msra.mxu0 0
      %1709 = vmatprep.subr.bf16.mxu0 0
      %1710 = vmatpush1.bf16.msra.mxu0 0
      %1711 = vmatprep.subr.bf16.mxu0 0
      %1712 = vmatpush1.bf16.msra.mxu0 0
      %1713 = vmatprep.mubr.bf16.mxu0 0
      %1714 = vmatmul.mubr.bf16.gmra.mrb[0].mxu0 %v1011
      %v1715 = vpop.f32.mrb[0].mxu0
      %v1716 = vadd.f32 0.0, %v1715
      %v1717 = vpop.f32.mrb[0].mxu0
      %v1718 = vpop.f32.mrb[0].mxu0
      %v1719 = vadd.f32 0.0, %v1718
      %v1720 = vpop.f32.mrb[0].mxu0
      %1721 = vmatprep.mubr.bf16.mxu0 0
      %1722 = vmatmul.mubr.bf16.gmra.mrb[0].mxu0 %v1014
      %v1723 = vpop.f32.mrb[0].mxu0
      %v1724 = vadd.f32 0.0, %v1723
      %v1725 = vpop.f32.mrb[0].mxu0
      %v1726 = vpop.f32.mrb[0].mxu0
      %v1727 = vadd.f32 0.0, %v1726
      %v1728 = vpop.f32.mrb[0].mxu0
      %1729 = vmatprep.mubr.bf16.mxu0 0
      %1730 = vmatmul.mubr.bf16.gmra.mrb[0].mxu0 %v1017
      %v1731 = vpop.f32.mrb[0].mxu0
      %v1732 = vadd.f32 0.0, %v1731
      %v1733 = vpop.f32.mrb[0].mxu0
      %v1734 = vpop.f32.mrb[0].mxu0
      %v1735 = vadd.f32 0.0, %v1734
      %v1736 = vpop.f32.mrb[0].mxu0
      %1737 = vmatprep.mubr.bf16.mxu0 0
      %1738 = vmatmul.mubr.bf16.gmra.mrb[0].mxu0 %v1020
      %v1739 = vpop.f32.mrb[0].mxu0
      %v1740 = vadd.f32 0.0, %v1739
      %v1741 = vpop.f32.mrb[0].mxu0
      %v1742 = vpop.f32.mrb[0].mxu0
      %v1743 = vadd.f32 0.0, %v1742
      %v1744 = vpop.f32.mrb[0].mxu0
      %1745 = vmatprep.mubr.bf16.mxu0 0
      %1746 = vmatmul.mubr.bf16.gmra.mrb[0].mxu0 %v1023
      %v1747 = vpop.f32.mrb[0].mxu0
      %v1748 = vadd.f32 0.0, %v1747
      %v1749 = vpop.f32.mrb[0].mxu0
      %v1750 = vpop.f32.mrb[0].mxu0
      %v1751 = vadd.f32 0.0, %v1750
      %v1752 = vpop.f32.mrb[0].mxu0
      %1753 = vmatprep.mubr.bf16.mxu0 0
      %1754 = vmatmul.mubr.bf16.gmra.mrb[0].mxu0 %v1026
      %v1755 = vpop.f32.mrb[0].mxu0
      %v1756 = vadd.f32 0.0, %v1755
      %v1757 = vpop.f32.mrb[0].mxu0
      %v1758 = vpop.f32.mrb[0].mxu0
      %v1759 = vadd.f32 0.0, %v1758
      %v1760 = vpop.f32.mrb[0].mxu0
      %1761 = vmatprep.mubr.bf16.mxu0 0
      %1762 = vmatmul.mubr.bf16.gmra.mrb[0].mxu0 %v1029
      %v1763 = vpop.f32.mrb[0].mxu0
      %v1764 = vadd.f32 0.0, %v1763
      %v1765 = vpop.f32.mrb[0].mxu0
      %v1766 = vpop.f32.mrb[0].mxu0
      %v1767 = vadd.f32 0.0, %v1766
      %v1768 = vpop.f32.mrb[0].mxu0
      %1769 = vmatprep.mubr.bf16.mxu0 0
      %1770 = vmatmul.mubr.bf16.gmra.mrb[0].mxu0 %v1032
      %v1771 = vpop.f32.mrb[0].mxu0
      %v1772 = vadd.f32 0.0, %v1771
      %v1773 = vpop.f32.mrb[0].mxu0
      %v1774 = vpop.f32.mrb[0].mxu0
      %v1775 = vadd.f32 0.0, %v1774
      %v1776 = vpop.f32.mrb[0].mxu0
      %1777 = vmatprep.mubr.bf16.mxu0 0
      %1778 = vmatmul.mubr.bf16.gmra.mrb[0].mxu0 %v1035
      %v1779 = vpop.f32.mrb[0].mxu0
      %v1780 = vadd.f32 0.0, %v1779
      %v1781 = vpop.f32.mrb[0].mxu0
      %v1782 = vpop.f32.mrb[0].mxu0
      %v1783 = vadd.f32 0.0, %v1782
      %v1784 = vpop.f32.mrb[0].mxu0
      %1785 = vmatprep.mubr.bf16.mxu0 0
      %1786 = vmatmul.mubr.bf16.gmra.mrb[0].mxu0 %v1038
      %v1787 = vpop.f32.mrb[0].mxu0
      %v1788 = vadd.f32 0.0, %v1787
      %v1789 = vpop.f32.mrb[0].mxu0
      %v1790 = vpop.f32.mrb[0].mxu0
      %v1791 = vadd.f32 0.0, %v1790
      %v1792 = vpop.f32.mrb[0].mxu0
      %1793 = vmatprep.mubr.bf16.mxu0 0
      %1794 = vmatmul.mubr.bf16.gmra.mrb[0].mxu0 %v1041
      %v1795 = vpop.f32.mrb[0].mxu0
      %v1796 = vadd.f32 0.0, %v1795
      %v1797 = vpop.f32.mrb[0].mxu0
      %v1798 = vpop.f32.mrb[0].mxu0
      %v1799 = vadd.f32 0.0, %v1798
      %v1800 = vpop.f32.mrb[0].mxu0
      %1801 = vmatprep.mubr.bf16.mxu0 0
      %1802 = vmatmul.mubr.bf16.gmra.mrb[0].mxu0 %v1044
      %v1803 = vpop.f32.mrb[0].mxu0
      %v1804 = vadd.f32 0.0, %v1803
      %v1805 = vpop.f32.mrb[0].mxu0
      %v1806 = vpop.f32.mrb[0].mxu0
      %v1807 = vadd.f32 0.0, %v1806
      %v1808 = vpop.f32.mrb[0].mxu0
      %1809 = vmatprep.mubr.bf16.mxu0 0
      %1810 = vmatmul.mubr.bf16.gmra.mrb[0].mxu0 %v1047
      %v1811 = vpop.f32.mrb[0].mxu0
      %v1812 = vadd.f32 0.0, %v1811
      %v1813 = vpop.f32.mrb[0].mxu0
      %v1814 = vpop.f32.mrb[0].mxu0
      %v1815 = vadd.f32 0.0, %v1814
      %v1816 = vpop.f32.mrb[0].mxu0
      %1817 = vmatprep.mubr.bf16.mxu0 0
      %1818 = vmatmul.mubr.bf16.gmra.mrb[0].mxu0 %v1050
      %v1819 = vpop.f32.mrb[0].mxu0
      %v1820 = vadd.f32 0.0, %v1819
      %v1821 = vpop.f32.mrb[0].mxu0
      %v1822 = vpop.f32.mrb[0].mxu0
      %v1823 = vadd.f32 0.0, %v1822
      %v1824 = vpop.f32.mrb[0].mxu0
      %1825 = vmatprep.mubr.bf16.mxu0 0
      %1826 = vmatmul.mubr.bf16.gmra.mrb[0].mxu0 %v1053
      %v1827 = vpop.f32.mrb[0].mxu0
      %v1828 = vadd.f32 0.0, %v1827
      %v1829 = vpop.f32.mrb[0].mxu0
      %v1830 = vpop.f32.mrb[0].mxu0
      %v1831 = vadd.f32 0.0, %v1830
      %v1832 = vpop.f32.mrb[0].mxu0
      %1833 = vmatprep.mubr.bf16.mxu0 0
      %1834 = vmatmul.mubr.bf16.gmra.mrb[0].mxu0 %v1676
      %v1835 = vpop.f32.mrb[0].mxu0
      %v1836 = vadd.f32 0.0, %v1835
      %v1837 = vpop.f32.mrb[0].mxu0
      %v1838 = vpop.f32.mrb[0].mxu0
      %v1839 = vadd.f32 0.0, %v1838
      %v1840 = vpop.f32.mrb[0].mxu0
      %1841 = vdwg.mxu0
      %v1842 = vadd.f32 %v1633, %v1716
      %v1843 = vadd.f32 %v1634, %v1719
      %v1844 = vadd.f32 %v1635, %v1724
      %v1845 = vadd.f32 %v1636, %v1727
      %v1846 = vadd.f32 %v1637, %v1732
      %v1847 = vadd.f32 %v1638, %v1735
      %v1848 = vadd.f32 %v1639, %v1740
      %v1849 = vadd.f32 %v1640, %v1743
      %v1850 = vadd.f32 %v1641, %v1748
      %v1851 = vadd.f32 %v1642, %v1751
      %v1852 = vadd.f32 %v1643, %v1756
      %v1853 = vadd.f32 %v1644, %v1759
      %v1854 = vadd.f32 %v1645, %v1764
      %v1855 = vadd.f32 %v1646, %v1767
      %v1856 = vadd.f32 %v1647, %v1772
      %v1857 = vadd.f32 %v1648, %v1775
      %v1858 = vadd.f32 %v1649, %v1780
      %v1859 = vadd.f32 %v1650, %v1783
      %v1860 = vadd.f32 %v1651, %v1788
      %v1861 = vadd.f32 %v1652, %v1791
      %v1862 = vadd.f32 %v1653, %v1796
      %v1863 = vadd.f32 %v1654, %v1799
      %v1864 = vadd.f32 %v1655, %v1804
      %v1865 = vadd.f32 %v1656, %v1807
      %v1866 = vadd.f32 %v1657, %v1812
      %v1867 = vadd.f32 %v1658, %v1815
      %v1868 = vadd.f32 %v1659, %v1820
      %v1869 = vadd.f32 %v1660, %v1823
      %v1870 = vadd.f32 %v1661, %v1828
      %v1871 = vadd.f32 %v1662, %v1831
      %v1872 = vadd.f32 %v1663, %v1836
      %v1873 = vadd.f32 %v1664, %v1839
      %v1874 = vpack.c.bf16 %v252, %v251
      %s1875 = scalar_lea.vmem %s1, 12
      %v1876 = vld [vmem:[%s1875] sm:$0x3]
      %v1878 = vsel %vm450, %v1874, 0
      %v1881 = vsel %vm499, %v1876, 0
      %1883 = vmatprep.subr.bf16.mxu0 0
      %1884 = vmatpush1.bf16.msra.mxu0 %v1881
      %1885 = vmatprep.subr.bf16.mxu0 0
      %1886 = vmatpush1.bf16.msra.mxu0 0
      %1887 = vmatprep.subr.bf16.mxu0 0
      %1888 = vmatpush1.bf16.msra.mxu0 0
      %1889 = vmatprep.subr.bf16.mxu0 0
      %1890 = vmatpush1.bf16.msra.mxu0 0
      %1891 = vmatprep.subr.bf16.mxu0 0
      %1892 = vmatpush1.bf16.msra.mxu0 0
      %1893 = vmatprep.subr.bf16.mxu0 0
      %1894 = vmatpush1.bf16.msra.mxu0 0
      %1895 = vmatprep.subr.bf16.mxu0 0
      %1896 = vmatpush1.bf16.msra.mxu0 0
      %1897 = vmatprep.subr.bf16.mxu0 0
      %1898 = vmatpush1.bf16.msra.mxu0 0
      %1899 = vmatprep.subr.bf16.mxu0 0
      %1900 = vmatpush1.bf16.msra.mxu0 0
      %1901 = vmatprep.subr.bf16.mxu0 0
      %1902 = vmatpush1.bf16.msra.mxu0 0
      %1903 = vmatprep.subr.bf16.mxu0 0
      %1904 = vmatpush1.bf16.msra.mxu0 0
      %1905 = vmatprep.subr.bf16.mxu0 0
      %1906 = vmatpush1.bf16.msra.mxu0 0
      %1907 = vmatprep.subr.bf16.mxu0 0
      %1908 = vmatpush1.bf16.msra.mxu0 0
      %1909 = vmatprep.subr.bf16.mxu0 0
      %1910 = vmatpush1.bf16.msra.mxu0 0
      %1911 = vmatprep.subr.bf16.mxu0 0
      %1912 = vmatpush1.bf16.msra.mxu0 0
      %1913 = vmatprep.subr.bf16.mxu0 0
      %1914 = vmatpush1.bf16.msra.mxu0 0
      %1915 = vmatprep.mubr.bf16.mxu0 0
      %1916 = vmatmul.mubr.bf16.gmra.mrb[0].mxu0 %v671
      %v1917 = vpop.f32.mrb[0].mxu0
      %v1918 = vadd.f32 0.0, %v1917
      %v1919 = vpop.f32.mrb[0].mxu0
      %v1920 = vpop.f32.mrb[0].mxu0
      %v1921 = vadd.f32 0.0, %v1920
      %v1922 = vpop.f32.mrb[0].mxu0
      %1923 = vmatprep.mubr.bf16.mxu0 0
      %1924 = vmatmul.mubr.bf16.gmra.mrb[0].mxu0 %v674
      %v1925 = vpop.f32.mrb[0].mxu0
      %v1926 = vadd.f32 0.0, %v1925
      %v1927 = vpop.f32.mrb[0].mxu0
      %v1928 = vpop.f32.mrb[0].mxu0
      %v1929 = vadd.f32 0.0, %v1928
      %v1930 = vpop.f32.mrb[0].mxu0
      %1931 = vmatprep.mubr.bf16.mxu0 0
      %1932 = vmatmul.mubr.bf16.gmra.mrb[0].mxu0 %v677
      %v1933 = vpop.f32.mrb[0].mxu0
      %v1934 = vadd.f32 0.0, %v1933
      %v1935 = vpop.f32.mrb[0].mxu0
      %v1936 = vpop.f32.mrb[0].mxu0
      %v1937 = vadd.f32 0.0, %v1936
      %v1938 = vpop.f32.mrb[0].mxu0
      %1939 = vmatprep.mubr.bf16.mxu0 0
      %1940 = vmatmul.mubr.bf16.gmra.mrb[0].mxu0 %v680
      %v1941 = vpop.f32.mrb[0].mxu0
      %v1942 = vadd.f32 0.0, %v1941
      %v1943 = vpop.f32.mrb[0].mxu0
      %v1944 = vpop.f32.mrb[0].mxu0
      %v1945 = vadd.f32 0.0, %v1944
      %v1946 = vpop.f32.mrb[0].mxu0
      %1947 = vmatprep.mubr.bf16.mxu0 0
      %1948 = vmatmul.mubr.bf16.gmra.mrb[0].mxu0 %v683
      %v1949 = vpop.f32.mrb[0].mxu0
      %v1950 = vadd.f32 0.0, %v1949
      %v1951 = vpop.f32.mrb[0].mxu0
      %v1952 = vpop.f32.mrb[0].mxu0
      %v1953 = vadd.f32 0.0, %v1952
      %v1954 = vpop.f32.mrb[0].mxu0
      %1955 = vmatprep.mubr.bf16.mxu0 0
      %1956 = vmatmul.mubr.bf16.gmra.mrb[0].mxu0 %v686
      %v1957 = vpop.f32.mrb[0].mxu0
      %v1958 = vadd.f32 0.0, %v1957
      %v1959 = vpop.f32.mrb[0].mxu0
      %v1960 = vpop.f32.mrb[0].mxu0
      %v1961 = vadd.f32 0.0, %v1960
      %v1962 = vpop.f32.mrb[0].mxu0
      %1963 = vmatprep.mubr.bf16.mxu0 0
      %1964 = vmatmul.mubr.bf16.gmra.mrb[0].mxu0 %v689
      %v1965 = vpop.f32.mrb[0].mxu0
      %v1966 = vadd.f32 0.0, %v1965
      %v1967 = vpop.f32.mrb[0].mxu0
      %v1968 = vpop.f32.mrb[0].mxu0
      %v1969 = vadd.f32 0.0, %v1968
      %v1970 = vpop.f32.mrb[0].mxu0
      %1971 = vmatprep.mubr.bf16.mxu0 0
      %1972 = vmatmul.mubr.bf16.gmra.mrb[0].mxu0 %v692
      %v1973 = vpop.f32.mrb[0].mxu0
      %v1974 = vadd.f32 0.0, %v1973
      %v1975 = vpop.f32.mrb[0].mxu0
      %v1976 = vpop.f32.mrb[0].mxu0
      %v1977 = vadd.f32 0.0, %v1976
      %v1978 = vpop.f32.mrb[0].mxu0
      %1979 = vmatprep.mubr.bf16.mxu0 0
      %1980 = vmatmul.mubr.bf16.gmra.mrb[0].mxu0 %v695
      %v1981 = vpop.f32.mrb[0].mxu0
      %v1982 = vadd.f32 0.0, %v1981
      %v1983 = vpop.f32.mrb[0].mxu0
      %v1984 = vpop.f32.mrb[0].mxu0
      %v1985 = vadd.f32 0.0, %v1984
      %v1986 = vpop.f32.mrb[0].mxu0
      %1987 = vmatprep.mubr.bf16.mxu0 0
      %1988 = vmatmul.mubr.bf16.gmra.mrb[0].mxu0 %v698
      %v1989 = vpop.f32.mrb[0].mxu0
      %v1990 = vadd.f32 0.0, %v1989
      %v1991 = vpop.f32.mrb[0].mxu0
      %v1992 = vpop.f32.mrb[0].mxu0
      %v1993 = vadd.f32 0.0, %v1992
      %v1994 = vpop.f32.mrb[0].mxu0
      %1995 = vmatprep.mubr.bf16.mxu0 0
      %1996 = vmatmul.mubr.bf16.gmra.mrb[0].mxu0 %v701
      %v1997 = vpop.f32.mrb[0].mxu0
      %v1998 = vadd.f32 0.0, %v1997
      %v1999 = vpop.f32.mrb[0].mxu0
      %v2000 = vpop.f32.mrb[0].mxu0
      %v2001 = vadd.f32 0.0, %v2000
      %v2002 = vpop.f32.mrb[0].mxu0
      %2003 = vmatprep.mubr.bf16.mxu0 0
      %2004 = vmatmul.mubr.bf16.gmra.mrb[0].mxu0 %v704
      %v2005 = vpop.f32.mrb[0].mxu0
      %v2006 = vadd.f32 0.0, %v2005
      %v2007 = vpop.f32.mrb[0].mxu0
      %v2008 = vpop.f32.mrb[0].mxu0
      %v2009 = vadd.f32 0.0, %v2008
      %v2010 = vpop.f32.mrb[0].mxu0
      %2011 = vmatprep.mubr.bf16.mxu0 0
      %2012 = vmatmul.mubr.bf16.gmra.mrb[0].mxu0 %v707
      %v2013 = vpop.f32.mrb[0].mxu0
      %v2014 = vadd.f32 0.0, %v2013
      %v2015 = vpop.f32.mrb[0].mxu0
      %v2016 = vpop.f32.mrb[0].mxu0
      %v2017 = vadd.f32 0.0, %v2016
      %v2018 = vpop.f32.mrb[0].mxu0
      %2019 = vmatprep.mubr.bf16.mxu0 0
      %2020 = vmatmul.mubr.bf16.gmra.mrb[0].mxu0 %v710
      %v2021 = vpop.f32.mrb[0].mxu0
      %v2022 = vadd.f32 0.0, %v2021
      %v2023 = vpop.f32.mrb[0].mxu0
      %v2024 = vpop.f32.mrb[0].mxu0
      %v2025 = vadd.f32 0.0, %v2024
      %v2026 = vpop.f32.mrb[0].mxu0
      %2027 = vmatprep.mubr.bf16.mxu0 0
      %2028 = vmatmul.mubr.bf16.gmra.mrb[0].mxu0 %v1255
      %v2029 = vpop.f32.mrb[0].mxu0
      %v2030 = vadd.f32 0.0, %v2029
      %v2031 = vpop.f32.mrb[0].mxu0
      %v2032 = vpop.f32.mrb[0].mxu0
      %v2033 = vadd.f32 0.0, %v2032
      %v2034 = vpop.f32.mrb[0].mxu0
      %2035 = vmatprep.mubr.bf16.mxu0 0
      %2036 = vmatmul.mubr.bf16.gmra.mrb[0].mxu0 %v1878
      %v2037 = vpop.f32.mrb[0].mxu0
      %v2038 = vadd.f32 0.0, %v2037
      %v2039 = vpop.f32.mrb[0].mxu0
      %v2040 = vpop.f32.mrb[0].mxu0
      %v2041 = vadd.f32 0.0, %v2040
      %v2042 = vpop.f32.mrb[0].mxu0
      %2043 = vdwg.mxu0
      %v2044 = vadd.f32 %v1842, %v1918
      %v2045 = vadd.f32 %v1843, %v1921
      %v2046 = vadd.f32 %v1844, %v1926
      %v2047 = vadd.f32 %v1845, %v1929
      %v2048 = vadd.f32 %v1846, %v1934
      %v2049 = vadd.f32 %v1847, %v1937
      %v2050 = vadd.f32 %v1848, %v1942
      %v2051 = vadd.f32 %v1849, %v1945
      %v2052 = vadd.f32 %v1850, %v1950
      %v2053 = vadd.f32 %v1851, %v1953
      %v2054 = vadd.f32 %v1852, %v1958
      %v2055 = vadd.f32 %v1853, %v1961
      %v2056 = vadd.f32 %v1854, %v1966
      %v2057 = vadd.f32 %v1855, %v1969
      %v2058 = vadd.f32 %v1856, %v1974
      %v2059 = vadd.f32 %v1857, %v1977
      %v2060 = vadd.f32 %v1858, %v1982
      %v2061 = vadd.f32 %v1859, %v1985
      %v2062 = vadd.f32 %v1860, %v1990
      %v2063 = vadd.f32 %v1861, %v1993
      %v2064 = vadd.f32 %v1862, %v1998
      %v2065 = vadd.f32 %v1863, %v2001
      %v2066 = vadd.f32 %v1864, %v2006
      %v2067 = vadd.f32 %v1865, %v2009
      %v2068 = vadd.f32 %v1866, %v2014
      %v2069 = vadd.f32 %v1867, %v2017
      %v2070 = vadd.f32 %v1868, %v2022
      %v2071 = vadd.f32 %v1869, %v2025
      %v2072 = vadd.f32 %v1870, %v2030
      %v2073 = vadd.f32 %v1871, %v2033
      %v2074 = vadd.f32 %v1872, %v2038
      %v2075 = vadd.f32 %v1873, %v2041
      %v2079 = vrot.slane %v251, 1
      %v2080 = vrot.slane %v252, 1
      %v2081 = vsel %vm319, %v2079, %v2080
      %v2082 = vrot.slane %v253, 1
      %v2083 = vsel %vm319, %v2080, %v2082
      %v2086 = vpack.c.bf16 %v2083, %v2081
      %s2087 = scalar_lea.vmem %s1, 14
      %v2088 = vld [vmem:[%s2087] sm:$0x3]
      %v2090 = vsel %vm450, %v2086, 0
      %v2093 = vsel %vm499, %v2088, 0
      %2095 = vmatprep.subr.bf16.mxu0 0
      %2096 = vmatpush1.bf16.msra.mxu0 %v2093
      %2097 = vmatprep.subr.bf16.mxu0 0
      %2098 = vmatpush1.bf16.msra.mxu0 0
      %2099 = vmatprep.subr.bf16.mxu0 0
      %2100 = vmatpush1.bf16.msra.mxu0 0
      %2101 = vmatprep.subr.bf16.mxu0 0
      %2102 = vmatpush1.bf16.msra.mxu0 0
      %2103 = vmatprep.subr.bf16.mxu0 0
      %2104 = vmatpush1.bf16.msra.mxu0 0
      %2105 = vmatprep.subr.bf16.mxu0 0
      %2106 = vmatpush1.bf16.msra.mxu0 0
      %2107 = vmatprep.subr.bf16.mxu0 0
      %2108 = vmatpush1.bf16.msra.mxu0 0
      %2109 = vmatprep.subr.bf16.mxu0 0
      %2110 = vmatpush1.bf16.msra.mxu0 0
      %2111 = vmatprep.subr.bf16.mxu0 0
      %2112 = vmatpush1.bf16.msra.mxu0 0
      %2113 = vmatprep.subr.bf16.mxu0 0
      %2114 = vmatpush1.bf16.msra.mxu0 0
      %2115 = vmatprep.subr.bf16.mxu0 0
      %2116 = vmatpush1.bf16.msra.mxu0 0
      %2117 = vmatprep.subr.bf16.mxu0 0
      %2118 = vmatpush1.bf16.msra.mxu0 0
      %2119 = vmatprep.subr.bf16.mxu0 0
      %2120 = vmatpush1.bf16.msra.mxu0 0
      %2121 = vmatprep.subr.bf16.mxu0 0
      %2122 = vmatpush1.bf16.msra.mxu0 0
      %2123 = vmatprep.subr.bf16.mxu0 0
      %2124 = vmatpush1.bf16.msra.mxu0 0
      %2125 = vmatprep.subr.bf16.mxu0 0
      %2126 = vmatpush1.bf16.msra.mxu0 0
      %2127 = vmatprep.mubr.bf16.mxu0 0
      %2128 = vmatmul.mubr.bf16.gmra.mrb[0].mxu0 %v458
      %v2129 = vpop.f32.mrb[0].mxu0
      %v2130 = vadd.f32 0.0, %v2129
      %v2131 = vpop.f32.mrb[0].mxu0
      %v2132 = vpop.f32.mrb[0].mxu0
      %v2133 = vadd.f32 0.0, %v2132
      %v2134 = vpop.f32.mrb[0].mxu0
      %2135 = vmatprep.mubr.bf16.mxu0 0
      %2136 = vmatmul.mubr.bf16.gmra.mrb[0].mxu0 %v461
      %v2137 = vpop.f32.mrb[0].mxu0
      %v2138 = vadd.f32 0.0, %v2137
      %v2139 = vpop.f32.mrb[0].mxu0
      %v2140 = vpop.f32.mrb[0].mxu0
      %v2141 = vadd.f32 0.0, %v2140
      %v2142 = vpop.f32.mrb[0].mxu0
      %2143 = vmatprep.mubr.bf16.mxu0 0
      %2144 = vmatmul.mubr.bf16.gmra.mrb[0].mxu0 %v464
      %v2145 = vpop.f32.mrb[0].mxu0
      %v2146 = vadd.f32 0.0, %v2145
      %v2147 = vpop.f32.mrb[0].mxu0
      %v2148 = vpop.f32.mrb[0].mxu0
      %v2149 = vadd.f32 0.0, %v2148
      %v2150 = vpop.f32.mrb[0].mxu0
      %2151 = vmatprep.mubr.bf16.mxu0 0
      %2152 = vmatmul.mubr.bf16.gmra.mrb[0].mxu0 %v467
      %v2153 = vpop.f32.mrb[0].mxu0
      %v2154 = vadd.f32 0.0, %v2153
      %v2155 = vpop.f32.mrb[0].mxu0
      %v2156 = vpop.f32.mrb[0].mxu0
      %v2157 = vadd.f32 0.0, %v2156
      %v2158 = vpop.f32.mrb[0].mxu0
      %2159 = vmatprep.mubr.bf16.mxu0 0
      %2160 = vmatmul.mubr.bf16.gmra.mrb[0].mxu0 %v470
      %v2161 = vpop.f32.mrb[0].mxu0
      %v2162 = vadd.f32 0.0, %v2161
      %v2163 = vpop.f32.mrb[0].mxu0
      %v2164 = vpop.f32.mrb[0].mxu0
      %v2165 = vadd.f32 0.0, %v2164
      %v2166 = vpop.f32.mrb[0].mxu0
      %2167 = vmatprep.mubr.bf16.mxu0 0
      %2168 = vmatmul.mubr.bf16.gmra.mrb[0].mxu0 %v473
      %v2169 = vpop.f32.mrb[0].mxu0
      %v2170 = vadd.f32 0.0, %v2169
      %v2171 = vpop.f32.mrb[0].mxu0
      %v2172 = vpop.f32.mrb[0].mxu0
      %v2173 = vadd.f32 0.0, %v2172
      %v2174 = vpop.f32.mrb[0].mxu0
      %2175 = vmatprep.mubr.bf16.mxu0 0
      %2176 = vmatmul.mubr.bf16.gmra.mrb[0].mxu0 %v476
      %v2177 = vpop.f32.mrb[0].mxu0
      %v2178 = vadd.f32 0.0, %v2177
      %v2179 = vpop.f32.mrb[0].mxu0
      %v2180 = vpop.f32.mrb[0].mxu0
      %v2181 = vadd.f32 0.0, %v2180
      %v2182 = vpop.f32.mrb[0].mxu0
      %2183 = vmatprep.mubr.bf16.mxu0 0
      %2184 = vmatmul.mubr.bf16.gmra.mrb[0].mxu0 %v479
      %v2185 = vpop.f32.mrb[0].mxu0
      %v2186 = vadd.f32 0.0, %v2185
      %v2187 = vpop.f32.mrb[0].mxu0
      %v2188 = vpop.f32.mrb[0].mxu0
      %v2189 = vadd.f32 0.0, %v2188
      %v2190 = vpop.f32.mrb[0].mxu0
      %2191 = vmatprep.mubr.bf16.mxu0 0
      %2192 = vmatmul.mubr.bf16.gmra.mrb[0].mxu0 %v482
      %v2193 = vpop.f32.mrb[0].mxu0
      %v2194 = vadd.f32 0.0, %v2193
      %v2195 = vpop.f32.mrb[0].mxu0
      %v2196 = vpop.f32.mrb[0].mxu0
      %v2197 = vadd.f32 0.0, %v2196
      %v2198 = vpop.f32.mrb[0].mxu0
      %2199 = vmatprep.mubr.bf16.mxu0 0
      %2200 = vmatmul.mubr.bf16.gmra.mrb[0].mxu0 %v485
      %v2201 = vpop.f32.mrb[0].mxu0
      %v2202 = vadd.f32 0.0, %v2201
      %v2203 = vpop.f32.mrb[0].mxu0
      %v2204 = vpop.f32.mrb[0].mxu0
      %v2205 = vadd.f32 0.0, %v2204
      %v2206 = vpop.f32.mrb[0].mxu0
      %2207 = vmatprep.mubr.bf16.mxu0 0
      %2208 = vmatmul.mubr.bf16.gmra.mrb[0].mxu0 %v488
      %v2209 = vpop.f32.mrb[0].mxu0
      %v2210 = vadd.f32 0.0, %v2209
      %v2211 = vpop.f32.mrb[0].mxu0
      %v2212 = vpop.f32.mrb[0].mxu0
      %v2213 = vadd.f32 0.0, %v2212
      %v2214 = vpop.f32.mrb[0].mxu0
      %2215 = vmatprep.mubr.bf16.mxu0 0
      %2216 = vmatmul.mubr.bf16.gmra.mrb[0].mxu0 %v491
      %v2217 = vpop.f32.mrb[0].mxu0
      %v2218 = vadd.f32 0.0, %v2217
      %v2219 = vpop.f32.mrb[0].mxu0
      %v2220 = vpop.f32.mrb[0].mxu0
      %v2221 = vadd.f32 0.0, %v2220
      %v2222 = vpop.f32.mrb[0].mxu0
      %2223 = vmatprep.mubr.bf16.mxu0 0
      %2224 = vmatmul.mubr.bf16.gmra.mrb[0].mxu0 %v494
      %v2225 = vpop.f32.mrb[0].mxu0
      %v2226 = vadd.f32 0.0, %v2225
      %v2227 = vpop.f32.mrb[0].mxu0
      %v2228 = vpop.f32.mrb[0].mxu0
      %v2229 = vadd.f32 0.0, %v2228
      %v2230 = vpop.f32.mrb[0].mxu0
      %2231 = vmatprep.mubr.bf16.mxu0 0
      %2232 = vmatmul.mubr.bf16.gmra.mrb[0].mxu0 %v497
      %v2233 = vpop.f32.mrb[0].mxu0
      %v2234 = vadd.f32 0.0, %v2233
      %v2235 = vpop.f32.mrb[0].mxu0
      %v2236 = vpop.f32.mrb[0].mxu0
      %v2237 = vadd.f32 0.0, %v2236
      %v2238 = vpop.f32.mrb[0].mxu0
      %2239 = vmatprep.mubr.bf16.mxu0 0
      %2240 = vmatmul.mubr.bf16.gmra.mrb[0].mxu0 %v1467
      %v2241 = vpop.f32.mrb[0].mxu0
      %v2242 = vadd.f32 0.0, %v2241
      %v2243 = vpop.f32.mrb[0].mxu0
      %v2244 = vpop.f32.mrb[0].mxu0
      %v2245 = vadd.f32 0.0, %v2244
      %v2246 = vpop.f32.mrb[0].mxu0
      %2247 = vmatprep.mubr.bf16.mxu0 0
      %2248 = vmatmul.mubr.bf16.gmra.mrb[0].mxu0 %v2090
      %v2249 = vpop.f32.mrb[0].mxu0
      %v2250 = vadd.f32 0.0, %v2249
      %v2251 = vpop.f32.mrb[0].mxu0
      %v2252 = vpop.f32.mrb[0].mxu0
      %v2253 = vadd.f32 0.0, %v2252
      %v2254 = vpop.f32.mrb[0].mxu0
      %2255 = vdwg.mxu0
      %v2256 = vadd.f32 %v2044, %v2130
      %v2257 = vadd.f32 %v2045, %v2133
      %v2258 = vadd.f32 %v2046, %v2138
      %v2259 = vadd.f32 %v2047, %v2141
      %v2260 = vadd.f32 %v2048, %v2146
      %v2261 = vadd.f32 %v2049, %v2149
      %v2262 = vadd.f32 %v2050, %v2154
      %v2263 = vadd.f32 %v2051, %v2157
      %v2264 = vadd.f32 %v2052, %v2162
      %v2265 = vadd.f32 %v2053, %v2165
      %v2266 = vadd.f32 %v2054, %v2170
      %v2267 = vadd.f32 %v2055, %v2173
      %v2268 = vadd.f32 %v2056, %v2178
      %v2269 = vadd.f32 %v2057, %v2181
      %v2270 = vadd.f32 %v2058, %v2186
      %v2271 = vadd.f32 %v2059, %v2189
      %v2272 = vadd.f32 %v2060, %v2194
      %v2273 = vadd.f32 %v2061, %v2197
      %v2274 = vadd.f32 %v2062, %v2202
      %v2275 = vadd.f32 %v2063, %v2205
      %v2276 = vadd.f32 %v2064, %v2210
      %v2277 = vadd.f32 %v2065, %v2213
      %v2278 = vadd.f32 %v2066, %v2218
      %v2279 = vadd.f32 %v2067, %v2221
      %v2280 = vadd.f32 %v2068, %v2226
      %v2281 = vadd.f32 %v2069, %v2229
      %v2282 = vadd.f32 %v2070, %v2234
      %v2283 = vadd.f32 %v2071, %v2237
      %v2284 = vadd.f32 %v2072, %v2242
      %v2285 = vadd.f32 %v2073, %v2245
      %v2286 = vadd.f32 %v2074, %v2250
      %v2287 = vadd.f32 %v2075, %v2253
      %v2288 = vrot.slane %v251, 2
      %v2289 = vrot.slane %v252, 2
      %v2290 = vsel %vm876, %v2288, %v2289
      %v2291 = vrot.slane %v253, 2
      %v2292 = vsel %vm876, %v2289, %v2291
      %v2295 = vpack.c.bf16 %v2292, %v2290
      %s2296 = scalar_lea.vmem %s1, 16
      %v2297 = vld [vmem:[%s2296] sm:$0x3]
      %v2299 = vsel %vm450, %v2295, 0
      %v2302 = vsel %vm499, %v2297, 0
      %2304 = vmatprep.subr.bf16.mxu0 0
      %2305 = vmatpush1.bf16.msra.mxu0 %v2302
      %2306 = vmatprep.subr.bf16.mxu0 0
      %2307 = vmatpush1.bf16.msra.mxu0 0
      %2308 = vmatprep.subr.bf16.mxu0 0
      %2309 = vmatpush1.bf16.msra.mxu0 0
      %2310 = vmatprep.subr.bf16.mxu0 0
      %2311 = vmatpush1.bf16.msra.mxu0 0
      %2312 = vmatprep.subr.bf16.mxu0 0
      %2313 = vmatpush1.bf16.msra.mxu0 0
      %2314 = vmatprep.subr.bf16.mxu0 0
      %2315 = vmatpush1.bf16.msra.mxu0 0
      %2316 = vmatprep.subr.bf16.mxu0 0
      %2317 = vmatpush1.bf16.msra.mxu0 0
      %2318 = vmatprep.subr.bf16.mxu0 0
      %2319 = vmatpush1.bf16.msra.mxu0 0
      %2320 = vmatprep.subr.bf16.mxu0 0
      %2321 = vmatpush1.bf16.msra.mxu0 0
      %2322 = vmatprep.subr.bf16.mxu0 0
      %2323 = vmatpush1.bf16.msra.mxu0 0
      %2324 = vmatprep.subr.bf16.mxu0 0
      %2325 = vmatpush1.bf16.msra.mxu0 0
      %2326 = vmatprep.subr.bf16.mxu0 0
      %2327 = vmatpush1.bf16.msra.mxu0 0
      %2328 = vmatprep.subr.bf16.mxu0 0
      %2329 = vmatpush1.bf16.msra.mxu0 0
      %2330 = vmatprep.subr.bf16.mxu0 0
      %2331 = vmatpush1.bf16.msra.mxu0 0
      %2332 = vmatprep.subr.bf16.mxu0 0
      %2333 = vmatpush1.bf16.msra.mxu0 0
      %2334 = vmatprep.subr.bf16.mxu0 0
      %2335 = vmatpush1.bf16.msra.mxu0 0
      %2336 = vmatprep.mubr.bf16.mxu0 0
      %2337 = vmatmul.mubr.bf16.gmra.mrb[0].mxu0 %v1014
      %v2338 = vpop.f32.mrb[0].mxu0
      %v2339 = vadd.f32 0.0, %v2338
      %v2340 = vpop.f32.mrb[0].mxu0
      %v2341 = vpop.f32.mrb[0].mxu0
      %v2342 = vadd.f32 0.0, %v2341
      %v2343 = vpop.f32.mrb[0].mxu0
      %2344 = vmatprep.mubr.bf16.mxu0 0
      %2345 = vmatmul.mubr.bf16.gmra.mrb[0].mxu0 %v1017
      %v2346 = vpop.f32.mrb[0].mxu0
      %v2347 = vadd.f32 0.0, %v2346
      %v2348 = vpop.f32.mrb[0].mxu0
      %v2349 = vpop.f32.mrb[0].mxu0
      %v2350 = vadd.f32 0.0, %v2349
      %v2351 = vpop.f32.mrb[0].mxu0
      %2352 = vmatprep.mubr.bf16.mxu0 0
      %2353 = vmatmul.mubr.bf16.gmra.mrb[0].mxu0 %v1020
      %v2354 = vpop.f32.mrb[0].mxu0
      %v2355 = vadd.f32 0.0, %v2354
      %v2356 = vpop.f32.mrb[0].mxu0
      %v2357 = vpop.f32.mrb[0].mxu0
      %v2358 = vadd.f32 0.0, %v2357
      %v2359 = vpop.f32.mrb[0].mxu0
      %2360 = vmatprep.mubr.bf16.mxu0 0
      %2361 = vmatmul.mubr.bf16.gmra.mrb[0].mxu0 %v1023
      %v2362 = vpop.f32.mrb[0].mxu0
      %v2363 = vadd.f32 0.0, %v2362
      %v2364 = vpop.f32.mrb[0].mxu0
      %v2365 = vpop.f32.mrb[0].mxu0
      %v2366 = vadd.f32 0.0, %v2365
      %v2367 = vpop.f32.mrb[0].mxu0
      %2368 = vmatprep.mubr.bf16.mxu0 0
      %2369 = vmatmul.mubr.bf16.gmra.mrb[0].mxu0 %v1026
      %v2370 = vpop.f32.mrb[0].mxu0
      %v2371 = vadd.f32 0.0, %v2370
      %v2372 = vpop.f32.mrb[0].mxu0
      %v2373 = vpop.f32.mrb[0].mxu0
      %v2374 = vadd.f32 0.0, %v2373
      %v2375 = vpop.f32.mrb[0].mxu0
      %2376 = vmatprep.mubr.bf16.mxu0 0
      %2377 = vmatmul.mubr.bf16.gmra.mrb[0].mxu0 %v1029
      %v2378 = vpop.f32.mrb[0].mxu0
      %v2379 = vadd.f32 0.0, %v2378
      %v2380 = vpop.f32.mrb[0].mxu0
      %v2381 = vpop.f32.mrb[0].mxu0
      %v2382 = vadd.f32 0.0, %v2381
      %v2383 = vpop.f32.mrb[0].mxu0
      %2384 = vmatprep.mubr.bf16.mxu0 0
      %2385 = vmatmul.mubr.bf16.gmra.mrb[0].mxu0 %v1032
      %v2386 = vpop.f32.mrb[0].mxu0
      %v2387 = vadd.f32 0.0, %v2386
      %v2388 = vpop.f32.mrb[0].mxu0
      %v2389 = vpop.f32.mrb[0].mxu0
      %v2390 = vadd.f32 0.0, %v2389
      %v2391 = vpop.f32.mrb[0].mxu0
      %2392 = vmatprep.mubr.bf16.mxu0 0
      %2393 = vmatmul.mubr.bf16.gmra.mrb[0].mxu0 %v1035
      %v2394 = vpop.f32.mrb[0].mxu0
      %v2395 = vadd.f32 0.0, %v2394
      %v2396 = vpop.f32.mrb[0].mxu0
      %v2397 = vpop.f32.mrb[0].mxu0
      %v2398 = vadd.f32 0.0, %v2397
      %v2399 = vpop.f32.mrb[0].mxu0
      %2400 = vmatprep.mubr.bf16.mxu0 0
      %2401 = vmatmul.mubr.bf16.gmra.mrb[0].mxu0 %v1038
      %v2402 = vpop.f32.mrb[0].mxu0
      %v2403 = vadd.f32 0.0, %v2402
      %v2404 = vpop.f32.mrb[0].mxu0
      %v2405 = vpop.f32.mrb[0].mxu0
      %v2406 = vadd.f32 0.0, %v2405
      %v2407 = vpop.f32.mrb[0].mxu0
      %2408 = vmatprep.mubr.bf16.mxu0 0
      %2409 = vmatmul.mubr.bf16.gmra.mrb[0].mxu0 %v1041
      %v2410 = vpop.f32.mrb[0].mxu0
      %v2411 = vadd.f32 0.0, %v2410
      %v2412 = vpop.f32.mrb[0].mxu0
      %v2413 = vpop.f32.mrb[0].mxu0
      %v2414 = vadd.f32 0.0, %v2413
      %v2415 = vpop.f32.mrb[0].mxu0
      %2416 = vmatprep.mubr.bf16.mxu0 0
      %2417 = vmatmul.mubr.bf16.gmra.mrb[0].mxu0 %v1044
      %v2418 = vpop.f32.mrb[0].mxu0
      %v2419 = vadd.f32 0.0, %v2418
      %v2420 = vpop.f32.mrb[0].mxu0
      %v2421 = vpop.f32.mrb[0].mxu0
      %v2422 = vadd.f32 0.0, %v2421
      %v2423 = vpop.f32.mrb[0].mxu0
      %2424 = vmatprep.mubr.bf16.mxu0 0
      %2425 = vmatmul.mubr.bf16.gmra.mrb[0].mxu0 %v1047
      %v2426 = vpop.f32.mrb[0].mxu0
      %v2427 = vadd.f32 0.0, %v2426
      %v2428 = vpop.f32.mrb[0].mxu0
      %v2429 = vpop.f32.mrb[0].mxu0
      %v2430 = vadd.f32 0.0, %v2429
      %v2431 = vpop.f32.mrb[0].mxu0
      %2432 = vmatprep.mubr.bf16.mxu0 0
      %2433 = vmatmul.mubr.bf16.gmra.mrb[0].mxu0 %v1050
      %v2434 = vpop.f32.mrb[0].mxu0
      %v2435 = vadd.f32 0.0, %v2434
      %v2436 = vpop.f32.mrb[0].mxu0
      %v2437 = vpop.f32.mrb[0].mxu0
      %v2438 = vadd.f32 0.0, %v2437
      %v2439 = vpop.f32.mrb[0].mxu0
      %2440 = vmatprep.mubr.bf16.mxu0 0
      %2441 = vmatmul.mubr.bf16.gmra.mrb[0].mxu0 %v1053
      %v2442 = vpop.f32.mrb[0].mxu0
      %v2443 = vadd.f32 0.0, %v2442
      %v2444 = vpop.f32.mrb[0].mxu0
      %v2445 = vpop.f32.mrb[0].mxu0
      %v2446 = vadd.f32 0.0, %v2445
      %v2447 = vpop.f32.mrb[0].mxu0
      %2448 = vmatprep.mubr.bf16.mxu0 0
      %2449 = vmatmul.mubr.bf16.gmra.mrb[0].mxu0 %v1676
      %v2450 = vpop.f32.mrb[0].mxu0
      %v2451 = vadd.f32 0.0, %v2450
      %v2452 = vpop.f32.mrb[0].mxu0
      %v2453 = vpop.f32.mrb[0].mxu0
      %v2454 = vadd.f32 0.0, %v2453
      %v2455 = vpop.f32.mrb[0].mxu0
      %2456 = vmatprep.mubr.bf16.mxu0 0
      %2457 = vmatmul.mubr.bf16.gmra.mrb[0].mxu0 %v2299
      %v2458 = vpop.f32.mrb[0].mxu0
      %v2459 = vadd.f32 0.0, %v2458
      %v2460 = vpop.f32.mrb[0].mxu0
      %v2461 = vpop.f32.mrb[0].mxu0
      %v2462 = vadd.f32 0.0, %v2461
      %v2463 = vpop.f32.mrb[0].mxu0
      %2464 = vdwg.mxu0
      %v2465 = vadd.f32 %v2256, %v2339
      %v2466 = vadd.f32 %v2257, %v2342
      %v2467 = vadd.f32 %v2258, %v2347
      %v2468 = vadd.f32 %v2259, %v2350
      %v2469 = vadd.f32 %v2260, %v2355
      %v2470 = vadd.f32 %v2261, %v2358
      %v2471 = vadd.f32 %v2262, %v2363
      %v2472 = vadd.f32 %v2263, %v2366
      %v2473 = vadd.f32 %v2264, %v2371
      %v2474 = vadd.f32 %v2265, %v2374
      %v2475 = vadd.f32 %v2266, %v2379
      %v2476 = vadd.f32 %v2267, %v2382
      %v2477 = vadd.f32 %v2268, %v2387
      %v2478 = vadd.f32 %v2269, %v2390
      %v2479 = vadd.f32 %v2270, %v2395
      %v2480 = vadd.f32 %v2271, %v2398
      %v2481 = vadd.f32 %v2272, %v2403
      %v2482 = vadd.f32 %v2273, %v2406
      %v2483 = vadd.f32 %v2274, %v2411
      %v2484 = vadd.f32 %v2275, %v2414
      %v2485 = vadd.f32 %v2276, %v2419
      %v2486 = vadd.f32 %v2277, %v2422
      %v2487 = vadd.f32 %v2278, %v2427
      %v2488 = vadd.f32 %v2279, %v2430
      %v2489 = vadd.f32 %v2280, %v2435
      %v2490 = vadd.f32 %v2281, %v2438
      %v2491 = vadd.f32 %v2282, %v2443
      %v2492 = vadd.f32 %v2283, %v2446
      %v2493 = vadd.f32 %v2284, %v2451
      %v2494 = vadd.f32 %v2285, %v2454
      %v2495 = vadd.f32 %v2286, %v2459
      %v2496 = vadd.f32 %v2287, %v2462
      %v2497 = vld [vmem:[%s2] sm:$0x1]
      %v2499 = vlaneseq
      %v2500 = vshrl.u32 %v2499, 7
      %v2501 = vsub.s32 0, %v2500
      %v2502 = vrot.slane %v2497, %v2501
      %v2504 = vadd.f32 %v2465, %v2502
      %v2505 = vadd.f32 %v2466, %v2502
      %v2506 = vadd.f32 %v2467, %v2502
      %v2507 = vadd.f32 %v2468, %v2502
      %v2508 = vadd.f32 %v2469, %v2502
      %v2509 = vadd.f32 %v2470, %v2502
      %v2510 = vadd.f32 %v2471, %v2502
      %v2511 = vadd.f32 %v2472, %v2502
      %v2512 = vadd.f32 %v2473, %v2502
      %v2513 = vadd.f32 %v2474, %v2502
      %v2514 = vadd.f32 %v2475, %v2502
      %v2515 = vadd.f32 %v2476, %v2502
      %v2516 = vadd.f32 %v2477, %v2502
      %v2517 = vadd.f32 %v2478, %v2502
      %v2518 = vadd.f32 %v2479, %v2502
      %v2519 = vadd.f32 %v2480, %v2502
      %v2520 = vadd.f32 %v2481, %v2502
      %v2521 = vadd.f32 %v2482, %v2502
      %v2522 = vadd.f32 %v2483, %v2502
      %v2523 = vadd.f32 %v2484, %v2502
      %v2524 = vadd.f32 %v2485, %v2502
      %v2525 = vadd.f32 %v2486, %v2502
      %v2526 = vadd.f32 %v2487, %v2502
      %v2527 = vadd.f32 %v2488, %v2502
      %v2528 = vadd.f32 %v2489, %v2502
      %v2529 = vadd.f32 %v2490, %v2502
      %v2530 = vadd.f32 %v2491, %v2502
      %v2531 = vadd.f32 %v2492, %v2502
      %v2532 = vadd.f32 %v2493, %v2502
      %v2533 = vadd.f32 %v2494, %v2502
      %v2534 = vadd.f32 %v2495, %v2502
      %v2535 = vadd.f32 %v2496, %v2502
      %s2536 = sld [smem:[#allocation2]]
      %v2537 = vmax.f32 %v2504, 0.0
      %v2538 = vmax.f32 %v2505, 0.0
      %v2539 = vmax.f32 %v2506, 0.0
      %v2540 = vmax.f32 %v2507, 0.0
      %v2541 = vmax.f32 %v2508, 0.0
      %v2542 = vmax.f32 %v2509, 0.0
      %v2543 = vmax.f32 %v2510, 0.0
      %v2544 = vmax.f32 %v2511, 0.0
      %v2545 = vmax.f32 %v2512, 0.0
      %v2546 = vmax.f32 %v2513, 0.0
      %v2547 = vmax.f32 %v2514, 0.0
      %v2548 = vmax.f32 %v2515, 0.0
      %v2549 = vmax.f32 %v2516, 0.0
      %v2550 = vmax.f32 %v2517, 0.0
      %v2551 = vmax.f32 %v2518, 0.0
      %v2552 = vmax.f32 %v2519, 0.0
      %v2553 = vmax.f32 %v2520, 0.0
      %v2554 = vmax.f32 %v2521, 0.0
      %v2555 = vmax.f32 %v2522, 0.0
      %v2556 = vmax.f32 %v2523, 0.0
      %v2557 = vmax.f32 %v2524, 0.0
      %v2558 = vmax.f32 %v2525, 0.0
      %v2559 = vmax.f32 %v2526, 0.0
      %v2560 = vmax.f32 %v2527, 0.0
      %v2561 = vmax.f32 %v2528, 0.0
      %v2562 = vmax.f32 %v2529, 0.0
      %v2563 = vmax.f32 %v2530, 0.0
      %v2564 = vmax.f32 %v2531, 0.0
      %v2565 = vmax.f32 %v2532, 0.0
      %v2566 = vmax.f32 %v2533, 0.0
      %v2567 = vmax.f32 %v2534, 0.0
      %v2568 = vmax.f32 %v2535, 0.0
      %v2569 = vmin.f32 %v2504, 0.0
      %v2570 = vmin.f32 %v2505, 0.0
      %v2571 = vmin.f32 %v2506, 0.0
      %v2572 = vmin.f32 %v2507, 0.0
      %v2573 = vmin.f32 %v2508, 0.0
      %v2574 = vmin.f32 %v2509, 0.0
      %v2575 = vmin.f32 %v2510, 0.0
      %v2576 = vmin.f32 %v2511, 0.0
      %v2577 = vmin.f32 %v2512, 0.0
      %v2578 = vmin.f32 %v2513, 0.0
      %v2579 = vmin.f32 %v2514, 0.0
      %v2580 = vmin.f32 %v2515, 0.0
      %v2581 = vmin.f32 %v2516, 0.0
      %v2582 = vmin.f32 %v2517, 0.0
      %v2583 = vmin.f32 %v2518, 0.0
      %v2584 = vmin.f32 %v2519, 0.0
      %v2585 = vmin.f32 %v2520, 0.0
      %v2586 = vmin.f32 %v2521, 0.0
      %v2587 = vmin.f32 %v2522, 0.0
      %v2588 = vmin.f32 %v2523, 0.0
      %v2589 = vmin.f32 %v2524, 0.0
      %v2590 = vmin.f32 %v2525, 0.0
      %v2591 = vmin.f32 %v2526, 0.0
      %v2592 = vmin.f32 %v2527, 0.0
      %v2593 = vmin.f32 %v2528, 0.0
      %v2594 = vmin.f32 %v2529, 0.0
      %v2595 = vmin.f32 %v2530, 0.0
      %v2596 = vmin.f32 %v2531, 0.0
      %v2597 = vmin.f32 %v2532, 0.0
      %v2598 = vmin.f32 %v2533, 0.0
      %v2599 = vmin.f32 %v2534, 0.0
      %v2600 = vmin.f32 %v2535, 0.0
      %v2601 = vstv %s2536
      %v2602 = vmul.f32 %v2601, %v2569
      %v2603 = vmul.f32 %v2601, %v2570
      %v2604 = vmul.f32 %v2601, %v2571
      %v2605 = vmul.f32 %v2601, %v2572
      %v2606 = vmul.f32 %v2601, %v2573
      %v2607 = vmul.f32 %v2601, %v2574
      %v2608 = vmul.f32 %v2601, %v2575
      %v2609 = vmul.f32 %v2601, %v2576
      %v2610 = vmul.f32 %v2601, %v2577
      %v2611 = vmul.f32 %v2601, %v2578
      %v2612 = vmul.f32 %v2601, %v2579
      %v2613 = vmul.f32 %v2601, %v2580
      %v2614 = vmul.f32 %v2601, %v2581
      %v2615 = vmul.f32 %v2601, %v2582
      %v2616 = vmul.f32 %v2601, %v2583
      %v2617 = vmul.f32 %v2601, %v2584
      %v2618 = vmul.f32 %v2601, %v2585
      %v2619 = vmul.f32 %v2601, %v2586
      %v2620 = vmul.f32 %v2601, %v2587
      %v2621 = vmul.f32 %v2601, %v2588
      %v2622 = vmul.f32 %v2601, %v2589
      %v2623 = vmul.f32 %v2601, %v2590
      %v2624 = vmul.f32 %v2601, %v2591
      %v2625 = vmul.f32 %v2601, %v2592
      %v2626 = vmul.f32 %v2601, %v2593
      %v2627 = vmul.f32 %v2601, %v2594
      %v2628 = vmul.f32 %v2601, %v2595
      %v2629 = vmul.f32 %v2601, %v2596
      %v2630 = vmul.f32 %v2601, %v2597
      %v2631 = vmul.f32 %v2601, %v2598
      %v2632 = vmul.f32 %v2601, %v2599
      %v2633 = vmul.f32 %v2601, %v2600
      %v2634 = vadd.f32 %v2537, %v2602
      %v2635 = vadd.f32 %v2538, %v2603
      %v2636 = vadd.f32 %v2539, %v2604
      %v2637 = vadd.f32 %v2540, %v2605
      %v2638 = vadd.f32 %v2541, %v2606
      %v2639 = vadd.f32 %v2542, %v2607
      %v2640 = vadd.f32 %v2543, %v2608
      %v2641 = vadd.f32 %v2544, %v2609
      %v2642 = vadd.f32 %v2545, %v2610
      %v2643 = vadd.f32 %v2546, %v2611
      %v2644 = vadd.f32 %v2547, %v2612
      %v2645 = vadd.f32 %v2548, %v2613
      %v2646 = vadd.f32 %v2549, %v2614
      %v2647 = vadd.f32 %v2550, %v2615
      %v2648 = vadd.f32 %v2551, %v2616
      %v2649 = vadd.f32 %v2552, %v2617
      %v2650 = vadd.f32 %v2553, %v2618
      %v2651 = vadd.f32 %v2554, %v2619
      %v2652 = vadd.f32 %v2555, %v2620
      %v2653 = vadd.f32 %v2556, %v2621
      %v2654 = vadd.f32 %v2557, %v2622
      %v2655 = vadd.f32 %v2558, %v2623
      %v2656 = vadd.f32 %v2559, %v2624
      %v2657 = vadd.f32 %v2560, %v2625
      %v2658 = vadd.f32 %v2561, %v2626
      %v2659 = vadd.f32 %v2562, %v2627
      %v2660 = vadd.f32 %v2563, %v2628
      %v2661 = vadd.f32 %v2564, %v2629
      %v2662 = vadd.f32 %v2565, %v2630
      %v2663 = vadd.f32 %v2566, %v2631
      %v2664 = vadd.f32 %v2567, %v2632
      %v2665 = vadd.f32 %v2568, %v2633
      %vm2666 = vcmask 130048
      %2667 = vst.msk [vmem:[%s198] sm:$0xff] %vm2666, %v2634
      %2668 = vst.msk [vmem:[%s198 + $0x8] sm:$0xff] %vm2666, %v2635
      %2669 = vst.msk [vmem:[%s198 + $0x10] sm:$0xff] %vm2666, %v2636
      %2670 = vst.msk [vmem:[%s198 + $0x18] sm:$0xff] %vm2666, %v2637
      %2671 = vst.msk [vmem:[%s198 + $0x20] sm:$0xff] %vm2666, %v2638
      %2672 = vst.msk [vmem:[%s198 + $0x28] sm:$0xff] %vm2666, %v2639
      %2673 = vst.msk [vmem:[%s198 + $0x30] sm:$0xff] %vm2666, %v2640
      %2674 = vst.msk [vmem:[%s198 + $0x38] sm:$0xff] %vm2666, %v2641
      %2675 = vst.msk [vmem:[%s198 + $0x40] sm:$0xff] %vm2666, %v2642
      %2676 = vst.msk [vmem:[%s198 + $0x48] sm:$0xff] %vm2666, %v2643
      %2677 = vst.msk [vmem:[%s198 + $0x50] sm:$0xff] %vm2666, %v2644
      %2678 = vst.msk [vmem:[%s198 + $0x58] sm:$0xff] %vm2666, %v2645
      %2679 = vst.msk [vmem:[%s198 + $0x60] sm:$0xff] %vm2666, %v2646
      %2680 = vst.msk [vmem:[%s198 + $0x68] sm:$0xff] %vm2666, %v2647
      %2681 = vst.msk [vmem:[%s198 + $0x70] sm:$0xff] %vm2666, %v2648
      %2682 = vst.msk [vmem:[%s198 + $0x78] sm:$0xff] %vm2666, %v2649
      %2683 = vst.msk [vmem:[%s198 + $0x80] sm:$0xff] %vm2666, %v2650
      %2684 = vst.msk [vmem:[%s198 + $0x88] sm:$0xff] %vm2666, %v2651
      %2685 = vst.msk [vmem:[%s198 + $0x90] sm:$0xff] %vm2666, %v2652
      %2686 = vst.msk [vmem:[%s198 + $0x98] sm:$0xff] %vm2666, %v2653
      %2687 = vst.msk [vmem:[%s198 + $0xa0] sm:$0xff] %vm2666, %v2654
      %2688 = vst.msk [vmem:[%s198 + $0xa8] sm:$0xff] %vm2666, %v2655
      %2689 = vst.msk [vmem:[%s198 + $0xb0] sm:$0xff] %vm2666, %v2656
      %2690 = vst.msk [vmem:[%s198 + $0xb8] sm:$0xff] %vm2666, %v2657
      %2691 = vst.msk [vmem:[%s198 + $0xc0] sm:$0xff] %vm2666, %v2658
      %2692 = vst.msk [vmem:[%s198 + $0xc8] sm:$0xff] %vm2666, %v2659
      %2693 = vst.msk [vmem:[%s198 + $0xd0] sm:$0xff] %vm2666, %v2660
      %2694 = vst.msk [vmem:[%s198 + $0xd8] sm:$0xff] %vm2666, %v2661
      %2695 = vst.msk [vmem:[%s198 + $0xe0] sm:$0xff] %vm2666, %v2662
      %2696 = vst.msk [vmem:[%s198 + $0xe8] sm:$0xff] %vm2666, %v2663
      %2697 = vst.msk [vmem:[%s198 + $0xf0] sm:$0xff] %vm2666, %v2664
      %2698 = vst.msk [vmem:[%s198 + $0xf8] sm:$0xff] %vm2666, %v2665
      %p2699 = scmp.lt.s32.totalorder %s16, 1
      %s2700 = scalar_select %p2699, %s16, 1
      %s2701 = smul.addr %s2700, 32
      %s2702 = smul.addr %s2701, 8
      %s2703 = scalar_lea.vmem %s4, %s2702
      // Predicated region
      $region37: #{upsample_block_forward.1} parent=35 // pred_check
        %p2704 = pneg %p123
      $region38: #{upsample_block_forward.1} parent=35 // pred_check_branch
        %2706 = sbr.rel (%p2704) target = $region40
      $region39: #{upsample_block_forward.1} parent=35 // pred_region
        _
      $region40: #{upsample_block_forward.1} parent=35 // pred_fallthru
        _
    $region36: #{upsample_block_forward.1} parent=5 // pred_fallthru
      _
    %p2707 = scmp.le.s32.totalorder 2, %s11
    // Predicated region
    $region41: #{upsample_block_forward.1} parent=5 // pred_check
      %p2708 = pneg %p2707
    $region42: #{upsample_block_forward.1} parent=5 // pred_check_branch
      %2710 = sbr.rel (%p2708) target = $region44
    $region43: #{upsample_block_forward.1} parent=5 // pred_region
      %s2711 = ssub.s32 %s11, 2
      // Predicated region
      $region45: #{upsample_block_forward.1} parent=43 // pred_check
        %p2712 = pneg %p129
      $region46: #{upsample_block_forward.1} parent=43 // pred_check_branch
        %2714 = sbr.rel (%p2712) target = $region48
      $region47: #{upsample_block_forward.1} parent=43 // pred_region
        %p2715 = scmp.lt.s32.totalorder %s17, 1
        %s2716 = scalar_select %p2715, %s17, 1
        %s2717 = smul.addr %s2716, 32
        %s2718 = smul.addr %s2717, 8
        %s2719 = scalar_lea.vmem %s4, %s2718
      $region48: #{upsample_block_forward.1} parent=43 // pred_fallthru
        _
    $region44: #{upsample_block_forward.1} parent=5 // pred_fallthru
      _
  $region6: #{upsample_block_forward.1} parent=0 // loop_footer
    %s15 = sadd.s32 1, %s11
  $region7: #{upsample_block_forward.1} parent=0 // loop_footer_branch
    %10 = sbr.rel target = $region3
  $region8: #{upsample_block_forward.1} parent=0 // loop_exit
    _

</llo_original>
